<compile_context>
chip_gen: v7x
topology: tpu7x:2x2x1
jax: 0.10.0
libtpu: 0.0.40
codegen_flags: <defaults>
</compile_context>

<pallas_src>
import functools

import jax
import jax.numpy as jnp
from jax.experimental import pallas as pl
from jax.experimental.pallas import tpu as pltpu


def _round_up(n, m):
    return ((n + m - 1) // m) * m


def _mlp_kernel(x_ref, w1_ref, b1_ref, w2_ref, b2_ref,
                w3_ref, b3_ref, w4_ref, b4_ref, o_ref):
    # Four matmuls + bias + ReLU fused. The full (padded, lane-dense) weight
    # set is VMEM resident; only the batch dimension is tiled by the grid.
    # Dropout layers of the original module are identity at inference.
    cdt = w1_ref.dtype  # compute dtype of the MXU operands (f32 or bf16)

    h = jnp.dot(x_ref[...].astype(cdt), w1_ref[...],
                preferred_element_type=jnp.float32)
    h = jnp.maximum(h + b1_ref[...], 0.0)

    h = jnp.dot(h.astype(cdt), w2_ref[...], preferred_element_type=jnp.float32)
    h = jnp.maximum(h + b2_ref[...], 0.0)

    h = jnp.dot(h.astype(cdt), w3_ref[...], preferred_element_type=jnp.float32)
    h = jnp.maximum(h + b3_ref[...], 0.0)

    h = jnp.dot(h.astype(cdt), w4_ref[...], preferred_element_type=jnp.float32)
    o_ref[...] = (h + b4_ref[...]).astype(o_ref.dtype)


def prepare_params(params, compute_dtype=jnp.float32):
    """One-time (off the hot path) preparation of FCN_2 parameters.

    Pads every weight's output dim (and the chained input dims of later
    layers) up to a multiple of 128 so all matmul operands / the output store
    are lane-dense.  Zero-padded weight columns + zero biases keep the padded
    hidden lanes exactly 0 through ReLU, so no garbage leaks into later
    layers.  Weights are cast to `compute_dtype` (f32 or bf16); biases stay
    f32 since they are added to the f32 accumulator.

    Returns (prepared_param_dict, logical_out_features).
    """
    w1, w2, w3, w4 = params["w1"], params["w2"], params["w3"], params["w4"]
    b1, b2, b3, b4 = params["b1"], params["b2"], params["b3"], params["b4"]
    F = w1.shape[0]
    d1, d2, d3, d4 = w1.shape[1], w2.shape[1], w3.shape[1], w4.shape[1]
    p1, p2, p3, p4 = (_round_up(d, 128) for d in (d1, d2, d3, d4))

    def padw(w, rows, cols):
        r, c = w.shape
        return jnp.pad(w, ((0, rows - r), (0, cols - c))).astype(compute_dtype)

    def padb(b, cols):
        b = b.reshape(1, -1)
        return jnp.pad(b, ((0, 0), (0, cols - b.shape[1]))).astype(jnp.float32)

    prepared = {
        "w1": padw(w1, F, p1),  "b1": padb(b1, p1),   # x's feature dim is NOT padded
        "w2": padw(w2, p1, p2), "b2": padb(b2, p2),
        "w3": padw(w3, p2, p3), "b3": padb(b3, p3),
        "w4": padw(w4, p3, p4), "b4": padb(b4, p4),
    }
    prepared = jax.tree_util.tree_map(jax.block_until_ready, prepared)
    return prepared, d4


@functools.partial(jax.jit, static_argnames=("out_features", "block_b"))
def fcn2_forward(x, prepared, *, out_features, block_b=512):
    """Pallas forward pass of FCN_2 (inference).

    x:         (B, features) array (f32 or bf16)
    prepared:  dict from prepare_params() (pre-padded weights/biases)
    """
    B, F = x.shape
    w1, b1 = prepared["w1"], prepared["b1"]
    w2, b2 = prepared["w2"], prepared["b2"]
    w3, b3 = prepared["w3"], prepared["b3"]
    w4, b4 = prepared["w4"], prepared["b4"]
    assert w1.shape[0] == F, "x feature dim must match prepared w1"
    p4 = w4.shape[1]

    # Batch tile: as large as block_b, but always >= 2 grid steps when B > 8
    # so v7x's two TensorCores both get work on the "parallel" axis.
    bb = min(block_b, max(8, _round_up(pl.cdiv(B, 2), 8)))
    grid = (pl.cdiv(B, bb),)

    # Weights / biases: full-extent blocks with constant index maps so they
    # stay resident in VMEM across all batch grid steps.
    def resident(arr):
        return pl.BlockSpec(arr.shape, lambda i: (0, 0))

    # Advisory cost estimate so XLA schedules surrounding glue ops around this
    # tiny launch.
    flops = 2 * B * (w1.shape[0] * w1.shape[1] + w2.shape[0] * w2.shape[1]
                     + w3.shape[0] * w3.shape[1] + w4.shape[0] * w4.shape[1])
    param_bytes = sum(int(v.size) * v.dtype.itemsize
                      for v in (w1, b1, w2, b2, w3, b3, w4, b4))
    bytes_accessed = (B * F * x.dtype.itemsize + param_bytes
                      + B * p4 * x.dtype.itemsize)

    out_padded = pl.pallas_call(
        _mlp_kernel,
        out_shape=jax.ShapeDtypeStruct((B, p4), x.dtype),
        grid_spec=pl.GridSpec(
            grid=grid,
            in_specs=[
                # x: batch tiled, full (unpadded) feature extent -> no jnp.pad.
                pl.BlockSpec((bb, F), lambda i: (i, 0)),
                resident(w1), resident(b1),
                resident(w2), resident(b2),
                resident(w3), resident(b3),
                resident(w4), resident(b4),
            ],
            out_specs=pl.BlockSpec((bb, p4), lambda i: (i, 0)),
        ),
        compiler_params=pltpu.CompilerParams(
            dimension_semantics=("parallel",)),
        cost_estimate=pl.CostEstimate(
            flops=flops, transcendentals=0, bytes_accessed=bytes_accessed),
    )(x, w1, b1, w2, b2, w3, b3, w4, b4)

    # Slice back to the logical output width (rows beyond B never exist in
    # out_shape; a partial boundary block's OOB writes are discarded).
    return out_padded[:, :out_features]


def init_params(key, features, ln1, ln2, ln3, n_types):
    """PyTorch-style Linear init: U(-1/sqrt(fan_in), +1/sqrt(fan_in))."""
    dims = [(features, ln1), (ln1, ln2), (ln2, ln3), (ln3, n_types)]
    params = {}
    for idx, (fan_in, fan_out) in enumerate(dims, start=1):
        key, kw, kb = jax.random.split(key, 3)
        bound = 1.0 / jnp.sqrt(jnp.float32(fan_in))
        params[f"w{idx}"] = jax.random.uniform(
            kw, (fan_in, fan_out), jnp.float32, -bound, bound)
        params[f"b{idx}"] = jax.random.uniform(
            kb, (1, fan_out), jnp.float32, -bound, bound)
    return params


def reference_forward(x, params):
    h = jnp.maximum(x @ params["w1"] + params["b1"], 0.0)
    h = jnp.maximum(h @ params["w2"] + params["b2"], 0.0)
    h = jnp.maximum(h @ params["w3"] + params["b3"], 0.0)
    return h @ params["w4"] + params["b4"]


if __name__ == "__main__":
    # FCN_2 hidden widths (100/50/25/5) with a scaled-down feature dim and a
    # batch that gives two 256-row grid steps (exercises the batch pipeline
    # and the v7x dual-TC split).  The full-size features=14063 model works
    # with the same code (feature dim is consumed as a full-extent block).
    B, FEATURES = 512, 512
    LN1, LN2, LN3, N_TYPES = 100, 50, 25, 5

    key = jax.random.PRNGKey(0)
    key, kx = jax.random.split(key)
    x = jax.random.normal(kx, (B, FEATURES), jnp.float32)
    params = init_params(key, FEATURES, LN1, LN2, LN3, N_TYPES)
    ref = reference_forward(x, params)

    # ---- f32 path (default) -------------------------------------------------
    prepared_f32, out_features = prepare_params(params, jnp.float32)
    out = fcn2_forward(x, prepared_f32, out_features=out_features, block_b=512)
    out = jax.block_until_ready(out)
    assert out.shape == (B, N_TYPES)
    assert jnp.allclose(out, ref, atol=2e-3, rtol=2e-3), "f32 mismatch vs JAX reference"

    # ---- bf16 weight path (halved weight traffic, MXU bf16 rate) ------------
    prepared_bf16, _ = prepare_params(params, jnp.bfloat16)
    out_bf16 = fcn2_forward(x, prepared_bf16, out_features=out_features, block_b=512)
    out_bf16 = jax.block_until_ready(out_bf16)
    assert out_bf16.shape == (B, N_TYPES)
    assert float(jnp.max(jnp.abs(out_bf16 - ref))) < 5e-2, "bf16 mismatch vs JAX reference"

    # TODO(synk): training-mode Dropout (p=0.05) is not implemented; at
    # inference it is the identity, matching PyTorch eval() semantics.
    print("KERNEL_OK")
</pallas_src>

<mosaic_0001>
module attributes {stable_mosaic.version = 11 : i64} {
  func.func @_mlp_kernel(%arg0: i32, %arg1: memref<256x512xf32, #tpu.memory_space<vmem>>, %arg2: memref<512x128xf32, #tpu.memory_space<vmem>>, %arg3: memref<1x128xf32, #tpu.memory_space<vmem>>, %arg4: memref<128x128xf32, #tpu.memory_space<vmem>>, %arg5: memref<1x128xf32, #tpu.memory_space<vmem>>, %arg6: memref<128x128xf32, #tpu.memory_space<vmem>>, %arg7: memref<1x128xf32, #tpu.memory_space<vmem>>, %arg8: memref<128x128xf32, #tpu.memory_space<vmem>>, %arg9: memref<1x128xf32, #tpu.memory_space<vmem>>, %arg10: memref<256x128xf32, #tpu.memory_space<vmem>>) attributes {dimension_semantics = [#tpu.dimension_semantics<parallel>], iteration_bounds = array<i64: 2>, scalar_prefetch = 0 : i64, scratch_operands = 0 : i64, tpu.core_type = #tpu.core_type<tc>, window_params = [{transform_indices = @transform_0, window_bounds = array<i64: 256, 512>}, {pipeline_mode = #tpu.pipeline_mode<synchronous>, transform_indices = @transform_1, window_bounds = array<i64: 512, 128>}, {pipeline_mode = #tpu.pipeline_mode<synchronous>, transform_indices = @transform_2, window_bounds = array<i64: 1, 128>}, {pipeline_mode = #tpu.pipeline_mode<synchronous>, transform_indices = @transform_3, window_bounds = array<i64: 128, 128>}, {pipeline_mode = #tpu.pipeline_mode<synchronous>, transform_indices = @transform_4, window_bounds = array<i64: 1, 128>}, {pipeline_mode = #tpu.pipeline_mode<synchronous>, transform_indices = @transform_5, window_bounds = array<i64: 128, 128>}, {pipeline_mode = #tpu.pipeline_mode<synchronous>, transform_indices = @transform_6, window_bounds = array<i64: 1, 128>}, {pipeline_mode = #tpu.pipeline_mode<synchronous>, transform_indices = @transform_7, window_bounds = array<i64: 128, 128>}, {pipeline_mode = #tpu.pipeline_mode<synchronous>, transform_indices = @transform_8, window_bounds = array<i64: 1, 128>}, {transform_indices = @transform_9, window_bounds = array<i64: 256, 128>}]} {
    %c0 = arith.constant 0 : index
    %c0_0 = arith.constant 0 : index
    %0 = vector.load %arg1[%c0, %c0_0] : memref<256x512xf32, #tpu.memory_space<vmem>>, vector<256x512xf32>
    %c0_1 = arith.constant 0 : index
    %c0_2 = arith.constant 0 : index
    %1 = vector.load %arg2[%c0_1, %c0_2] : memref<512x128xf32, #tpu.memory_space<vmem>>, vector<512x128xf32>
    %cst = arith.constant dense<0.000000e+00> : vector<256x128xf32>
    %2 = tpu.matmul %0, %1, %cst {dimension_numbers = #tpu.dot_dimension_numbers<[1], [0], [0], [1], [0, 0, 1, 1], [], []>} : vector<256x512xf32>, vector<512x128xf32>, vector<256x128xf32> -> vector<256x128xf32>
    %c0_3 = arith.constant 0 : index
    %c0_4 = arith.constant 0 : index
    %3 = vector.load %arg3[%c0_3, %c0_4] : memref<1x128xf32, #tpu.memory_space<vmem>>, vector<1x128xf32>
    %4 = vector.broadcast %3 : vector<1x128xf32> to vector<256x128xf32>
    %5 = arith.addf %2, %4 : vector<256x128xf32>
    %cst_5 = arith.constant 0.000000e+00 : f32
    %6 = vector.broadcast %cst_5 : f32 to vector<256x128xf32>
    %7 = arith.maximumf %5, %6 : vector<256x128xf32>
    %c0_6 = arith.constant 0 : index
    %c0_7 = arith.constant 0 : index
    %8 = vector.load %arg4[%c0_6, %c0_7] : memref<128x128xf32, #tpu.memory_space<vmem>>, vector<128x128xf32>
    %cst_8 = arith.constant dense<0.000000e+00> : vector<256x128xf32>
    %9 = tpu.matmul %7, %8, %cst_8 {dimension_numbers = #tpu.dot_dimension_numbers<[1], [0], [0], [1], [0, 0, 1, 1], [], []>} : vector<256x128xf32>, vector<128x128xf32>, vector<256x128xf32> -> vector<256x128xf32>
    %c0_9 = arith.constant 0 : index
    %c0_10 = arith.constant 0 : index
    %10 = vector.load %arg5[%c0_9, %c0_10] : memref<1x128xf32, #tpu.memory_space<vmem>>, vector<1x128xf32>
    %11 = vector.broadcast %10 : vector<1x128xf32> to vector<256x128xf32>
    %12 = arith.addf %9, %11 : vector<256x128xf32>
    %cst_11 = arith.constant 0.000000e+00 : f32
    %13 = vector.broadcast %cst_11 : f32 to vector<256x128xf32>
    %14 = arith.maximumf %12, %13 : vector<256x128xf32>
    %c0_12 = arith.constant 0 : index
    %c0_13 = arith.constant 0 : index
    %15 = vector.load %arg6[%c0_12, %c0_13] : memref<128x128xf32, #tpu.memory_space<vmem>>, vector<128x128xf32>
    %cst_14 = arith.constant dense<0.000000e+00> : vector<256x128xf32>
    %16 = tpu.matmul %14, %15, %cst_14 {dimension_numbers = #tpu.dot_dimension_numbers<[1], [0], [0], [1], [0, 0, 1, 1], [], []>} : vector<256x128xf32>, vector<128x128xf32>, vector<256x128xf32> -> vector<256x128xf32>
    %c0_15 = arith.constant 0 : index
    %c0_16 = arith.constant 0 : index
    %17 = vector.load %arg7[%c0_15, %c0_16] : memref<1x128xf32, #tpu.memory_space<vmem>>, vector<1x128xf32>
    %18 = vector.broadcast %17 : vector<1x128xf32> to vector<256x128xf32>
    %19 = arith.addf %16, %18 : vector<256x128xf32>
    %cst_17 = arith.constant 0.000000e+00 : f32
    %20 = vector.broadcast %cst_17 : f32 to vector<256x128xf32>
    %21 = arith.maximumf %19, %20 : vector<256x128xf32>
    %c0_18 = arith.constant 0 : index
    %c0_19 = arith.constant 0 : index
    %22 = vector.load %arg8[%c0_18, %c0_19] : memref<128x128xf32, #tpu.memory_space<vmem>>, vector<128x128xf32>
    %cst_20 = arith.constant dense<0.000000e+00> : vector<256x128xf32>
    %23 = tpu.matmul %21, %22, %cst_20 {dimension_numbers = #tpu.dot_dimension_numbers<[1], [0], [0], [1], [0, 0, 1, 1], [], []>} : vector<256x128xf32>, vector<128x128xf32>, vector<256x128xf32> -> vector<256x128xf32>
    %c0_21 = arith.constant 0 : index
    %c0_22 = arith.constant 0 : index
    %24 = vector.load %arg9[%c0_21, %c0_22] : memref<1x128xf32, #tpu.memory_space<vmem>>, vector<1x128xf32>
    %25 = vector.broadcast %24 : vector<1x128xf32> to vector<256x128xf32>
    %26 = arith.addf %23, %25 : vector<256x128xf32>
    %c0_23 = arith.constant 0 : index
    %c0_24 = arith.constant 0 : index
    %27 = vector.load %arg10[%c0_23, %c0_24] : memref<256x128xf32, #tpu.memory_space<vmem>>, vector<256x128xf32>
    tpu.vector_store %arg10[%c0_23, %c0_24], %26 {strides = array<i32>} : memref<256x128xf32, #tpu.memory_space<vmem>>, vector<256x128xf32>,
    return
  }
  func.func @transform_0(%arg0: i32) -> (i32, i32) {
    %c0_i32 = arith.constant 0 : i32
    %c0_i32_0 = arith.constant 0 : i32
    return %arg0, %c0_i32 : i32, i32
  }
  func.func @transform_1(%arg0: i32) -> (i32, i32) {
    %c0_i32 = arith.constant 0 : i32
    %c0_i32_0 = arith.constant 0 : i32
    %c0_i32_1 = arith.constant 0 : i32
    return %c0_i32, %c0_i32_0 : i32, i32
  }
  func.func @transform_2(%arg0: i32) -> (i32, i32) {
    %c0_i32 = arith.constant 0 : i32
    %c0_i32_0 = arith.constant 0 : i32
    %c0_i32_1 = arith.constant 0 : i32
    return %c0_i32, %c0_i32_0 : i32, i32
  }
  func.func @transform_3(%arg0: i32) -> (i32, i32) {
    %c0_i32 = arith.constant 0 : i32
    %c0_i32_0 = arith.constant 0 : i32
    %c0_i32_1 = arith.constant 0 : i32
    return %c0_i32, %c0_i32_0 : i32, i32
  }
  func.func @transform_4(%arg0: i32) -> (i32, i32) {
    %c0_i32 = arith.constant 0 : i32
    %c0_i32_0 = arith.constant 0 : i32
    %c0_i32_1 = arith.constant 0 : i32
    return %c0_i32, %c0_i32_0 : i32, i32
  }
  func.func @transform_5(%arg0: i32) -> (i32, i32) {
    %c0_i32 = arith.constant 0 : i32
    %c0_i32_0 = arith.constant 0 : i32
    %c0_i32_1 = arith.constant 0 : i32
    return %c0_i32, %c0_i32_0 : i32, i32
  }
  func.func @transform_6(%arg0: i32) -> (i32, i32) {
    %c0_i32 = arith.constant 0 : i32
    %c0_i32_0 = arith.constant 0 : i32
    %c0_i32_1 = arith.constant 0 : i32
    return %c0_i32, %c0_i32_0 : i32, i32
  }
  func.func @transform_7(%arg0: i32) -> (i32, i32) {
    %c0_i32 = arith.constant 0 : i32
    %c0_i32_0 = arith.constant 0 : i32
    %c0_i32_1 = arith.constant 0 : i32
    return %c0_i32, %c0_i32_0 : i32, i32
  }
  func.func @transform_8(%arg0: i32) -> (i32, i32) {
    %c0_i32 = arith.constant 0 : i32
    %c0_i32_0 = arith.constant 0 : i32
    %c0_i32_1 = arith.constant 0 : i32
    return %c0_i32, %c0_i32_0 : i32, i32
  }
  func.func @transform_9(%arg0: i32) -> (i32, i32) {
    %c0_i32 = arith.constant 0 : i32
    %c0_i32_0 = arith.constant 0 : i32
    return %arg0, %c0_i32 : i32, i32
  }
}

</mosaic_0001>

<llo_original>
// kernel: fcn2_forward.1
$region0: #{fcn2_forward.1}
  #allocation0 [shape = 'u32[]', space=smem, size = 0x4, offset = 0x4, fixed_abs, tag = 'smem constant byte address 0x4 - core index']
  #allocation1 [shape = 'u32[144,128]{1,0:T(1,128)}', space=vmem, size = 0x12000, scoped, tag = 'internal scratch']
  %s0 = inlined_call_operand.hbm [shape: f32[512,512], index: 0, kind: input, shape index: {}]
  %s1 = inlined_call_operand.hbm [shape: f32[512,128], index: 1, kind: input, shape index: {}]
  %s2 = inlined_call_operand.vmem [shape: f32[1,128], index: 2, kind: input, shape index: {}]
  %s3 = inlined_call_operand.hbm [shape: f32[128,128], index: 3, kind: input, shape index: {}]
  %s4 = inlined_call_operand.vmem [shape: f32[1,128], index: 4, kind: input, shape index: {}]
  %s5 = inlined_call_operand.hbm [shape: f32[128,128], index: 5, kind: input, shape index: {}]
  %s6 = inlined_call_operand.vmem [shape: f32[1,128], index: 6, kind: input, shape index: {}]
  %s7 = inlined_call_operand.hbm [shape: f32[128,128], index: 7, kind: input, shape index: {}]
  %s8 = inlined_call_operand.vmem [shape: f32[1,128], index: 8, kind: input, shape index: {}]
  %s9 = inlined_call_operand.vmem [shape: f32[512,128], index: 9, kind: output, shape index: {}]
  %s10 = sld [smem:[#allocation0]]
  $region89: #{fcn2_forward.1} parent=0
    _
  %s12 = ssub.s32 1, %s10
  %s13 = scalar_select 0, %s12, %s10
  $region1: #{fcn2_forward.1} parent=0
    #allocation2 [shape = 'u8[1048576]{0}', space=vmem, size = 0x100000, scoped, tag = 'input window, operand 0']
    #allocation3 [shape = 's32[2]{0}', space=sflag, size = 0x8, scoped, tag = 'scoped memory for fcn2_forward.1']
    #allocation4 [shape = 'u8[262144]{0}', space=vmem, size = 0x40000, scoped, tag = 'input window, operand 1, single buffered']
    #allocation5 [shape = 's32[1]{0}', space=sflag, size = 0x4, scoped, tag = 'scoped memory for fcn2_forward.1']
    #allocation6 [shape = 'u8[65536]{0}', space=vmem, size = 0x10000, scoped, tag = 'input window, operand 3, single buffered']
    #allocation7 [shape = 'u8[65536]{0}', space=vmem, size = 0x10000, scoped, tag = 'input window, operand 5, single buffered']
    #allocation8 [shape = 's32[1]{0}', space=sflag, size = 0x4, scoped, tag = 'scoped memory for fcn2_forward.1']
    #allocation9 [shape = 'u8[65536]{0}', space=vmem, size = 0x10000, scoped, tag = 'input window, operand 7, single buffered']
    %14 = vsyncpa [#allocation3], 0
    %s15 = scalar_lea.sflag [#allocation3], 1
    %16 = vsyncpa %s15, 0
    %17 = vsyncpa [#allocation5], 0
    %18 = vsyncpa [#allocation8], 0
    loop: start=0, step=1, limit=4
    $region2: #{fcn2_forward.1} parent=1 // loop_pre_header
      _
    $region3: #{fcn2_forward.1} parent=1 // loop_header
      %s20 = sphi 0, %s24
      %p21 = scmp.ge.s32.totalorder %s20, 4
      %s30 = sphi 0, %s32
      %s33 = sphi 0, %s30
      %s34 = sphi 0, %s33
      %s50 = sphi 0, %s34
      %s54 = sphi 0, %s54
      %s56 = sphi 0, %s54
      %s57 = sphi 0, %s56
      %s71 = sphi 0, %s57
      %s75 = sphi 0, %s75
      %s77 = sphi 0, %s75
      %s78 = sphi 0, %s77
      %s92 = sphi 0, %s78
      %s96 = sphi 0, %s96
      %s98 = sphi 0, %s96
      %s99 = sphi 0, %s98
      %s113 = sphi 0, %s99
      %s117 = sphi 0, %s117
      %s119 = sphi 0, %s117
      %s120 = sphi 0, %s119
      %s134 = sphi 0, %s120
      %s138 = sphi 0, %s138
      %s140 = sphi 0, %s138
      %s141 = sphi 0, %s140
      %s155 = sphi 0, %s141
      %s159 = sphi 0, %s159
      %s161 = sphi 0, %s159
      %s162 = sphi 0, %s161
      %s176 = sphi 0, %s162
      %s180 = sphi 0, %s180
      %s182 = sphi 0, %s180
      %s183 = sphi 0, %s182
      %s197 = sphi 0, %s183
      %s201 = sphi 0, %s201
      %s203 = sphi 0, %s201
      %s204 = sphi 0, %s203
      %s218 = sphi 0, %s204
      %s224 = sphi 0, %s226
      %s227 = sphi 0, %s224
      %s228 = sphi 0, %s227
      %s244 = sphi 0, %s228
    $region4: #{fcn2_forward.1} parent=1 // loop_header_branch
      %23 = sbr.rel (%p21) target = $region8
    $region5: #{fcn2_forward.1} parent=1 // loop_body
      %s25 = ssub.s32 %s20, 1
      %s26 = ssub.s32 %s20, 2
      %s27 = sadd.s32 %s20, 1
      %s28 = ssub.s32 %s20, %s27
      %p29 = scmp.eq.s32.totalorder %s28, 0
      %s31 = sadd.s32 %s30, 1
      %s32 = scalar_select %p29, %s30, %s31
      %p35 = pneg %p29
      %p36 = scmp.eq.s32.totalorder %s20, 1
      %p37 = por %p35, %p36
      %p38 = scmp.ne.s32.totalorder %s30, %s33
      %p39 = scmp.eq.s32.totalorder %s20, 0
      %p40 = por %p38, %p39
      %p41 = scmp.ne.s32.totalorder %s30, %s33
      %p42 = scmp.eq.s32.totalorder %s25, 1
      %p43 = por %p41, %p42
      %p44 = scmp.ne.s32.totalorder %s33, %s34
      %p45 = scmp.eq.s32.totalorder %s25, 0
      %p46 = por %p44, %p45
      %p47 = scmp.ne.s32.totalorder %s33, %s34
      %p48 = scmp.eq.s32.totalorder %s26, 1
      %p49 = por %p47, %p48
      %p51 = scmp.ne.s32.totalorder %s34, %s50
      %p52 = scmp.eq.s32.totalorder %s26, 0
      %p53 = por %p51, %p52
      %s55 = sadd.s32 %s54, 1
      %p58 = scmp.eq.s32.totalorder %s20, 1
      %p59 = scmp.ne.s32.totalorder %s54, %s56
      %p60 = scmp.eq.s32.totalorder %s20, 0
      %p61 = por %p59, %p60
      %p62 = scmp.ne.s32.totalorder %s54, %s56
      %p63 = scmp.eq.s32.totalorder %s25, 1
      %p64 = por %p62, %p63
      %p65 = scmp.ne.s32.totalorder %s56, %s57
      %p66 = scmp.eq.s32.totalorder %s25, 0
      %p67 = por %p65, %p66
      %p68 = scmp.ne.s32.totalorder %s56, %s57
      %p69 = scmp.eq.s32.totalorder %s26, 1
      %p70 = por %p68, %p69
      %p72 = scmp.ne.s32.totalorder %s57, %s71
      %p73 = scmp.eq.s32.totalorder %s26, 0
      %p74 = por %p72, %p73
      %s76 = sadd.s32 %s75, 1
      %p79 = scmp.eq.s32.totalorder %s20, 1
      %p80 = scmp.ne.s32.totalorder %s75, %s77
      %p81 = scmp.eq.s32.totalorder %s20, 0
      %p82 = por %p80, %p81
      %p83 = scmp.ne.s32.totalorder %s75, %s77
      %p84 = scmp.eq.s32.totalorder %s25, 1
      %p85 = por %p83, %p84
      %p86 = scmp.ne.s32.totalorder %s77, %s78
      %p87 = scmp.eq.s32.totalorder %s25, 0
      %p88 = por %p86, %p87
      %p89 = scmp.ne.s32.totalorder %s77, %s78
      %p90 = scmp.eq.s32.totalorder %s26, 1
      %p91 = por %p89, %p90
      %p93 = scmp.ne.s32.totalorder %s78, %s92
      %p94 = scmp.eq.s32.totalorder %s26, 0
      %p95 = por %p93, %p94
      %s97 = sadd.s32 %s96, 1
      %p100 = scmp.eq.s32.totalorder %s20, 1
      %p101 = scmp.ne.s32.totalorder %s96, %s98
      %p102 = scmp.eq.s32.totalorder %s20, 0
      %p103 = por %p101, %p102
      %p104 = scmp.ne.s32.totalorder %s96, %s98
      %p105 = scmp.eq.s32.totalorder %s25, 1
      %p106 = por %p104, %p105
      %p107 = scmp.ne.s32.totalorder %s98, %s99
      %p108 = scmp.eq.s32.totalorder %s25, 0
      %p109 = por %p107, %p108
      %p110 = scmp.ne.s32.totalorder %s98, %s99
      %p111 = scmp.eq.s32.totalorder %s26, 1
      %p112 = por %p110, %p111
      %p114 = scmp.ne.s32.totalorder %s99, %s113
      %p115 = scmp.eq.s32.totalorder %s26, 0
      %p116 = por %p114, %p115
      %s118 = sadd.s32 %s117, 1
      %p121 = scmp.eq.s32.totalorder %s20, 1
      %p122 = scmp.ne.s32.totalorder %s117, %s119
      %p123 = scmp.eq.s32.totalorder %s20, 0
      %p124 = por %p122, %p123
      %p125 = scmp.ne.s32.totalorder %s117, %s119
      %p126 = scmp.eq.s32.totalorder %s25, 1
      %p127 = por %p125, %p126
      %p128 = scmp.ne.s32.totalorder %s119, %s120
      %p129 = scmp.eq.s32.totalorder %s25, 0
      %p130 = por %p128, %p129
      %p131 = scmp.ne.s32.totalorder %s119, %s120
      %p132 = scmp.eq.s32.totalorder %s26, 1
      %p133 = por %p131, %p132
      %p135 = scmp.ne.s32.totalorder %s120, %s134
      %p136 = scmp.eq.s32.totalorder %s26, 0
      %p137 = por %p135, %p136
      %s139 = sadd.s32 %s138, 1
      %p142 = scmp.eq.s32.totalorder %s20, 1
      %p143 = scmp.ne.s32.totalorder %s138, %s140
      %p144 = scmp.eq.s32.totalorder %s20, 0
      %p145 = por %p143, %p144
      %p146 = scmp.ne.s32.totalorder %s138, %s140
      %p147 = scmp.eq.s32.totalorder %s25, 1
      %p148 = por %p146, %p147
      %p149 = scmp.ne.s32.totalorder %s140, %s141
      %p150 = scmp.eq.s32.totalorder %s25, 0
      %p151 = por %p149, %p150
      %p152 = scmp.ne.s32.totalorder %s140, %s141
      %p153 = scmp.eq.s32.totalorder %s26, 1
      %p154 = por %p152, %p153
      %p156 = scmp.ne.s32.totalorder %s141, %s155
      %p157 = scmp.eq.s32.totalorder %s26, 0
      %p158 = por %p156, %p157
      %s160 = sadd.s32 %s159, 1
      %p163 = scmp.eq.s32.totalorder %s20, 1
      %p164 = scmp.ne.s32.totalorder %s159, %s161
      %p165 = scmp.eq.s32.totalorder %s20, 0
      %p166 = por %p164, %p165
      %p167 = scmp.ne.s32.totalorder %s159, %s161
      %p168 = scmp.eq.s32.totalorder %s25, 1
      %p169 = por %p167, %p168
      %p170 = scmp.ne.s32.totalorder %s161, %s162
      %p171 = scmp.eq.s32.totalorder %s25, 0
      %p172 = por %p170, %p171
      %p173 = scmp.ne.s32.totalorder %s161, %s162
      %p174 = scmp.eq.s32.totalorder %s26, 1
      %p175 = por %p173, %p174
      %p177 = scmp.ne.s32.totalorder %s162, %s176
      %p178 = scmp.eq.s32.totalorder %s26, 0
      %p179 = por %p177, %p178
      %s181 = sadd.s32 %s180, 1
      %p184 = scmp.eq.s32.totalorder %s20, 1
      %p185 = scmp.ne.s32.totalorder %s180, %s182
      %p186 = scmp.eq.s32.totalorder %s20, 0
      %p187 = por %p185, %p186
      %p188 = scmp.ne.s32.totalorder %s180, %s182
      %p189 = scmp.eq.s32.totalorder %s25, 1
      %p190 = por %p188, %p189
      %p191 = scmp.ne.s32.totalorder %s182, %s183
      %p192 = scmp.eq.s32.totalorder %s25, 0
      %p193 = por %p191, %p192
      %p194 = scmp.ne.s32.totalorder %s182, %s183
      %p195 = scmp.eq.s32.totalorder %s26, 1
      %p196 = por %p194, %p195
      %p198 = scmp.ne.s32.totalorder %s183, %s197
      %p199 = scmp.eq.s32.totalorder %s26, 0
      %p200 = por %p198, %p199
      %s202 = sadd.s32 %s201, 1
      %p205 = scmp.eq.s32.totalorder %s20, 1
      %p206 = scmp.ne.s32.totalorder %s201, %s203
      %p207 = scmp.eq.s32.totalorder %s20, 0
      %p208 = por %p206, %p207
      %p209 = scmp.ne.s32.totalorder %s201, %s203
      %p210 = scmp.eq.s32.totalorder %s25, 1
      %p211 = por %p209, %p210
      %p212 = scmp.ne.s32.totalorder %s203, %s204
      %p213 = scmp.eq.s32.totalorder %s25, 0
      %p214 = por %p212, %p213
      %p215 = scmp.ne.s32.totalorder %s203, %s204
      %p216 = scmp.eq.s32.totalorder %s26, 1
      %p217 = por %p215, %p216
      %p219 = scmp.ne.s32.totalorder %s204, %s218
      %p220 = scmp.eq.s32.totalorder %s26, 0
      %p221 = por %p219, %p220
      %s222 = ssub.s32 %s20, %s27
      %p223 = scmp.eq.s32.totalorder %s222, 0
      %s225 = sadd.s32 %s224, 1
      %s226 = scalar_select %p223, %s224, %s225
      %p229 = pneg %p223
      %p230 = scmp.eq.s32.totalorder %s20, 1
      %p231 = por %p229, %p230
      %p232 = scmp.ne.s32.totalorder %s224, %s227
      %p233 = scmp.eq.s32.totalorder %s20, 0
      %p234 = por %p232, %p233
      %p235 = scmp.ne.s32.totalorder %s224, %s227
      %p236 = scmp.eq.s32.totalorder %s25, 1
      %p237 = por %p235, %p236
      %p238 = scmp.ne.s32.totalorder %s227, %s228
      %p239 = scmp.eq.s32.totalorder %s25, 0
      %p240 = por %p238, %p239
      %p241 = scmp.ne.s32.totalorder %s227, %s228
      %p242 = scmp.eq.s32.totalorder %s26, 1
      %p243 = por %p241, %p242
      %p245 = scmp.ne.s32.totalorder %s228, %s244
      %p246 = scmp.eq.s32.totalorder %s26, 0
      %p247 = por %p245, %p246
      %p248 = scmp.le.s32.totalorder 1, %s20
      %p249 = scmp.lt.s32.totalorder %s20, 3
      %p250 = pnand %p248, %p249
      %p251 = pneg %p250
      // Predicated region
      $region9: #{fcn2_forward.1} parent=5 // pred_check
        _
      $region10: #{fcn2_forward.1} parent=5 // pred_check_branch
        %253 = sbr.rel (%p250) target = $region12
      $region11: #{fcn2_forward.1} parent=5 // pred_region
        %s254 = ssub.s32 %s20, 1
        // Predicated region
        $region13: #{fcn2_forward.1} parent=11 // pred_check
          %p255 = pneg %p67
        $region14: #{fcn2_forward.1} parent=11 // pred_check_branch
          %257 = sbr.rel (%p255) target = $region16
        $region15: #{fcn2_forward.1} parent=11 // pred_region
          %s259 = ssub.s32 8192, 8192
          %260 = vsyncadd [#allocation5], %s259
          %s261 = sshll.u32 [#allocation4], 4
          %s262 = int_to_ptr.vmem [resolvable:$true] %s261
          %267 = dma.hbm_to_vmem [thread:$0]  %s1, 8192, %s262, [#allocation5], 128, 128, 8
        $region16: #{fcn2_forward.1} parent=11 // pred_fallthru
          _
        // Predicated region
        $region17: #{fcn2_forward.1} parent=11 // pred_check
          %p268 = pneg %p88
        $region18: #{fcn2_forward.1} parent=11 // pred_check_branch
          %270 = sbr.rel (%p268) target = $region20
        $region19: #{fcn2_forward.1} parent=11 // pred_region
          _
        $region20: #{fcn2_forward.1} parent=11 // pred_fallthru
          _
        // Predicated region
        $region21: #{fcn2_forward.1} parent=11 // pred_check
          %p271 = pneg %p109
        $region22: #{fcn2_forward.1} parent=11 // pred_check_branch
          %273 = sbr.rel (%p271) target = $region24
        $region23: #{fcn2_forward.1} parent=11 // pred_region
          %s275 = ssub.s32 2048, 2048
          %276 = vsyncadd [#allocation5], %s275
          %s277 = sshll.u32 [#allocation6], 4
          %s278 = int_to_ptr.vmem [resolvable:$true] %s277
          %283 = dma.hbm_to_vmem [thread:$0]  %s3, 2048, %s278, [#allocation5], 128, 128, 8
        $region24: #{fcn2_forward.1} parent=11 // pred_fallthru
          _
        // Predicated region
        $region25: #{fcn2_forward.1} parent=11 // pred_check
          %p284 = pneg %p130
        $region26: #{fcn2_forward.1} parent=11 // pred_check_branch
          %286 = sbr.rel (%p284) target = $region28
        $region27: #{fcn2_forward.1} parent=11 // pred_region
          _
        $region28: #{fcn2_forward.1} parent=11 // pred_fallthru
          _
        // Predicated region
        $region29: #{fcn2_forward.1} parent=11 // pred_check
          %p287 = pneg %p151
        $region30: #{fcn2_forward.1} parent=11 // pred_check_branch
          %289 = sbr.rel (%p287) target = $region32
        $region31: #{fcn2_forward.1} parent=11 // pred_region
          %s291 = ssub.s32 2048, 2048
          %292 = vsyncadd [#allocation8], %s291
          %s293 = sshll.u32 [#allocation7], 4
          %s294 = int_to_ptr.vmem [resolvable:$true] %s293
          %299 = dma.hbm_to_vmem [thread:$0]  %s5, 2048, %s294, [#allocation8], 128, 128, 8
        $region32: #{fcn2_forward.1} parent=11 // pred_fallthru
          _
        // Predicated region
        $region33: #{fcn2_forward.1} parent=11 // pred_check
          %p300 = pneg %p172
        $region34: #{fcn2_forward.1} parent=11 // pred_check_branch
          %302 = sbr.rel (%p300) target = $region36
        $region35: #{fcn2_forward.1} parent=11 // pred_region
          _
        $region36: #{fcn2_forward.1} parent=11 // pred_fallthru
          _
        // Predicated region
        $region37: #{fcn2_forward.1} parent=11 // pred_check
          %p303 = pneg %p193
        $region38: #{fcn2_forward.1} parent=11 // pred_check_branch
          %305 = sbr.rel (%p303) target = $region40
        $region39: #{fcn2_forward.1} parent=11 // pred_region
          %s307 = ssub.s32 2048, 2048
          %308 = vsyncadd [#allocation8], %s307
          %s309 = sshll.u32 [#allocation9], 4
          %s310 = int_to_ptr.vmem [resolvable:$true] %s309
          %315 = dma.hbm_to_vmem [thread:$0]  %s7, 2048, %s310, [#allocation8], 128, 128, 8
        $region40: #{fcn2_forward.1} parent=11 // pred_fallthru
          _
        // Predicated region
        $region41: #{fcn2_forward.1} parent=11 // pred_check
          %p316 = pneg %p214
        $region42: #{fcn2_forward.1} parent=11 // pred_check_branch
          %318 = sbr.rel (%p316) target = $region44
        $region43: #{fcn2_forward.1} parent=11 // pred_region
          _
        $region44: #{fcn2_forward.1} parent=11 // pred_fallthru
          _
      $region12: #{fcn2_forward.1} parent=5 // pred_fallthru
        _
      %p319 = scmp.lt.s32.totalorder %s20, 2
      // Predicated region
      $region45: #{fcn2_forward.1} parent=5 // pred_check
        %p320 = pneg %p319
      $region46: #{fcn2_forward.1} parent=5 // pred_check_branch
        %322 = sbr.rel (%p320) target = $region48
      $region47: #{fcn2_forward.1} parent=5 // pred_region
        // Predicated region
        $region49: #{fcn2_forward.1} parent=47 // pred_check
          %p323 = pneg %p40
        $region50: #{fcn2_forward.1} parent=47 // pred_check_branch
          %325 = sbr.rel (%p323) target = $region52
        $region51: #{fcn2_forward.1} parent=47 // pred_region
          %s326 = sand.u32 %s30, 1
          %s327 = scalar_lea.sflag [#allocation3], %s326
          %s328 = sand.u32 %s30, 1
          %s329 = smul.addr %s328, 1024
          %s330 = scalar_lea.vmem [#allocation2], %s329
          %s331 = smul.u32 32, %s20
          %s333 = ssub.s32 16384, 16384
          %334 = vsyncadd %s327, %s333
          %s335 = smul.addr %s331, 4
          %s336 = smul.addr %s335, 128
          %s337 = scalar_lea.hbm %s0, %s336
          %s338 = sshll.u32 %s330, 4
          %s339 = int_to_ptr.vmem [resolvable:$true] %s338
          %344 = dma.hbm_to_vmem [thread:$0]  %s337, 16384, %s339, %s327, 512, 512, 32
        $region52: #{fcn2_forward.1} parent=47 // pred_fallthru
          _
      $region48: #{fcn2_forward.1} parent=5 // pred_fallthru
        _
      %p345 = scmp.le.s32.totalorder 1, %s20
      %p346 = scmp.lt.s32.totalorder %s20, 3
      %p347 = pnand %p345, %p346
      %p348 = pneg %p347
      // Predicated region
      $region53: #{fcn2_forward.1} parent=5 // pred_check
        _
      $region54: #{fcn2_forward.1} parent=5 // pred_check_branch
        %350 = sbr.rel (%p347) target = $region56
      $region55: #{fcn2_forward.1} parent=5 // pred_region
        %s351 = ssub.s32 %s20, 1
        %s352 = sand.u32 %s33, 1
        %s353 = scalar_lea.sflag [#allocation3], %s352
        %s354 = sand.u32 %s33, 1
        %s355 = smul.addr %s354, 1024
        %s356 = scalar_lea.vmem [#allocation2], %s355
        // Predicated region
        $region57: #{fcn2_forward.1} parent=55 // pred_check
          %p357 = pneg %p46
        $region58: #{fcn2_forward.1} parent=55 // pred_check_branch
          %359 = sbr.rel (%p357) target = $region60
        $region59: #{fcn2_forward.1} parent=55 // pred_region
          %360 = dma.done %s353, 16384
        $region60: #{fcn2_forward.1} parent=55 // pred_fallthru
          _
        // Predicated region
        $region61: #{fcn2_forward.1} parent=55 // pred_check
          %p361 = pneg %p67
        $region62: #{fcn2_forward.1} parent=55 // pred_check_branch
          %363 = sbr.rel (%p361) target = $region64
        $region63: #{fcn2_forward.1} parent=55 // pred_region
          %364 = dma.done [#allocation5], 8192
        $region64: #{fcn2_forward.1} parent=55 // pred_fallthru
          _
        // Predicated region
        $region65: #{fcn2_forward.1} parent=55 // pred_check
          %p365 = pneg %p109
        $region66: #{fcn2_forward.1} parent=55 // pred_check_branch
          %367 = sbr.rel (%p365) target = $region68
        $region67: #{fcn2_forward.1} parent=55 // pred_region
          %368 = dma.done [#allocation5], 2048
        $region68: #{fcn2_forward.1} parent=55 // pred_fallthru
          _
        // Predicated region
        $region69: #{fcn2_forward.1} parent=55 // pred_check
          %p369 = pneg %p151
        $region70: #{fcn2_forward.1} parent=55 // pred_check_branch
          %371 = sbr.rel (%p369) target = $region72
        $region71: #{fcn2_forward.1} parent=55 // pred_region
          %372 = dma.done [#allocation8], 2048
        $region72: #{fcn2_forward.1} parent=55 // pred_fallthru
          _
        // Predicated region
        $region73: #{fcn2_forward.1} parent=55 // pred_check
          %p373 = pneg %p193
        $region74: #{fcn2_forward.1} parent=55 // pred_check_branch
          %375 = sbr.rel (%p373) target = $region76
        $region75: #{fcn2_forward.1} parent=55 // pred_region
          %376 = dma.done [#allocation8], 2048
        $region76: #{fcn2_forward.1} parent=55 // pred_fallthru
          _
        %s377 = sand.u32 %s33, 1
        %s378 = scalar_lea.sflag [#allocation3], %s377
        %s379 = sand.u32 %s33, 1
        %s380 = smul.addr %s379, 1024
        %s381 = scalar_lea.vmem [#allocation2], %s380
        %p382 = pneg %p46
        %p383 = pneg %p43
        %p384 = pneg %p67
        %p385 = pneg %p64
        %p386 = pneg %p88
        %p387 = pneg %p85
        %p388 = pneg %p109
        %p389 = pneg %p106
        %p390 = pneg %p130
        %p391 = pneg %p127
        %p392 = pneg %p151
        %p393 = pneg %p148
        %p394 = pneg %p172
        %p395 = pneg %p169
        %p396 = pneg %p193
        %p397 = pneg %p190
        %p398 = pneg %p214
        %p399 = pneg %p211
        %p400 = pneg %p240
        %p401 = pneg %p237
        %s402 = smul.u32 32, %s25
        %p403 = scmp.lt.s32.totalorder %s402, 63
        %s404 = scalar_select %p403, %s402, 63
        %s405 = smul.addr %s404, 8
        %s406 = scalar_lea.vmem %s9, %s405
        %s407 = smul.u32 32, %s25
        %s408 = smul.u32 32, %s25
        %p409 = scmp.lt.s32.totalorder %s408, 63
        %s410 = scalar_select %p409, %s408, 63
        %s411 = smul.addr %s410, 8
        %s412 = scalar_lea.vmem %s9, %s411
        %s413 = smul.u32 32, %s25
        %v414 = vld [vmem:[%s356] sm:$0xff]
        %v415 = vld [vmem:[%s356 + $0x8] sm:$0xff]
        %v416 = vld [vmem:[%s356 + $0x10] sm:$0xff]
        %v417 = vld [vmem:[%s356 + $0x18] sm:$0xff]
        %v418 = vld [vmem:[%s356 + $0x20] sm:$0xff]
        %v419 = vld [vmem:[%s356 + $0x28] sm:$0xff]
        %v420 = vld [vmem:[%s356 + $0x30] sm:$0xff]
        %v421 = vld [vmem:[%s356 + $0x38] sm:$0xff]
        %v422 = vld [vmem:[%s356 + $0x40] sm:$0xff]
        %v423 = vld [vmem:[%s356 + $0x48] sm:$0xff]
        %v424 = vld [vmem:[%s356 + $0x50] sm:$0xff]
        %v425 = vld [vmem:[%s356 + $0x58] sm:$0xff]
        %v426 = vld [vmem:[%s356 + $0x60] sm:$0xff]
        %v427 = vld [vmem:[%s356 + $0x68] sm:$0xff]
        %v428 = vld [vmem:[%s356 + $0x70] sm:$0xff]
        %v429 = vld [vmem:[%s356 + $0x78] sm:$0xff]
        %v430 = vld [vmem:[%s356 + $0x80] sm:$0xff]
        %v431 = vld [vmem:[%s356 + $0x88] sm:$0xff]
        %v432 = vld [vmem:[%s356 + $0x90] sm:$0xff]
        %v433 = vld [vmem:[%s356 + $0x98] sm:$0xff]
        %v434 = vld [vmem:[%s356 + $0xa0] sm:$0xff]
        %v435 = vld [vmem:[%s356 + $0xa8] sm:$0xff]
        %v436 = vld [vmem:[%s356 + $0xb0] sm:$0xff]
        %v437 = vld [vmem:[%s356 + $0xb8] sm:$0xff]
        %v438 = vld [vmem:[%s356 + $0xc0] sm:$0xff]
        %v439 = vld [vmem:[%s356 + $0xc8] sm:$0xff]
        %v440 = vld [vmem:[%s356 + $0xd0] sm:$0xff]
        %v441 = vld [vmem:[%s356 + $0xd8] sm:$0xff]
        %v442 = vld [vmem:[%s356 + $0xe0] sm:$0xff]
        %v443 = vld [vmem:[%s356 + $0xe8] sm:$0xff]
        %v444 = vld [vmem:[%s356 + $0xf0] sm:$0xff]
        %v445 = vld [vmem:[%s356 + $0xf8] sm:$0xff]
        %v446 = vld [vmem:[%s356 + $0x100] sm:$0xff]
        %v447 = vld [vmem:[%s356 + $0x108] sm:$0xff]
        %v448 = vld [vmem:[%s356 + $0x110] sm:$0xff]
        %v449 = vld [vmem:[%s356 + $0x118] sm:$0xff]
        %v450 = vld [vmem:[%s356 + $0x120] sm:$0xff]
        %v451 = vld [vmem:[%s356 + $0x128] sm:$0xff]
        %v452 = vld [vmem:[%s356 + $0x130] sm:$0xff]
        %v453 = vld [vmem:[%s356 + $0x138] sm:$0xff]
        %v454 = vld [vmem:[%s356 + $0x140] sm:$0xff]
        %v455 = vld [vmem:[%s356 + $0x148] sm:$0xff]
        %v456 = vld [vmem:[%s356 + $0x150] sm:$0xff]
        %v457 = vld [vmem:[%s356 + $0x158] sm:$0xff]
        %v458 = vld [vmem:[%s356 + $0x160] sm:$0xff]
        %v459 = vld [vmem:[%s356 + $0x168] sm:$0xff]
        %v460 = vld [vmem:[%s356 + $0x170] sm:$0xff]
        %v461 = vld [vmem:[%s356 + $0x178] sm:$0xff]
        %v462 = vld [vmem:[%s356 + $0x180] sm:$0xff]
        %v463 = vld [vmem:[%s356 + $0x188] sm:$0xff]
        %v464 = vld [vmem:[%s356 + $0x190] sm:$0xff]
        %v465 = vld [vmem:[%s356 + $0x198] sm:$0xff]
        %v466 = vld [vmem:[%s356 + $0x1a0] sm:$0xff]
        %v467 = vld [vmem:[%s356 + $0x1a8] sm:$0xff]
        %v468 = vld [vmem:[%s356 + $0x1b0] sm:$0xff]
        %v469 = vld [vmem:[%s356 + $0x1b8] sm:$0xff]
        %v470 = vld [vmem:[%s356 + $0x1c0] sm:$0xff]
        %v471 = vld [vmem:[%s356 + $0x1c8] sm:$0xff]
        %v472 = vld [vmem:[%s356 + $0x1d0] sm:$0xff]
        %v473 = vld [vmem:[%s356 + $0x1d8] sm:$0xff]
        %v474 = vld [vmem:[%s356 + $0x1e0] sm:$0xff]
        %v475 = vld [vmem:[%s356 + $0x1e8] sm:$0xff]
        %v476 = vld [vmem:[%s356 + $0x1f0] sm:$0xff]
        %v477 = vld [vmem:[%s356 + $0x1f8] sm:$0xff]
        %v478 = vld [vmem:[%s356 + $0x200] sm:$0xff]
        %v479 = vld [vmem:[%s356 + $0x208] sm:$0xff]
        %v480 = vld [vmem:[%s356 + $0x210] sm:$0xff]
        %v481 = vld [vmem:[%s356 + $0x218] sm:$0xff]
        %v482 = vld [vmem:[%s356 + $0x220] sm:$0xff]
        %v483 = vld [vmem:[%s356 + $0x228] sm:$0xff]
        %v484 = vld [vmem:[%s356 + $0x230] sm:$0xff]
        %v485 = vld [vmem:[%s356 + $0x238] sm:$0xff]
        %v486 = vld [vmem:[%s356 + $0x240] sm:$0xff]
        %v487 = vld [vmem:[%s356 + $0x248] sm:$0xff]
        %v488 = vld [vmem:[%s356 + $0x250] sm:$0xff]
        %v489 = vld [vmem:[%s356 + $0x258] sm:$0xff]
        %v490 = vld [vmem:[%s356 + $0x260] sm:$0xff]
        %v491 = vld [vmem:[%s356 + $0x268] sm:$0xff]
        %v492 = vld [vmem:[%s356 + $0x270] sm:$0xff]
        %v493 = vld [vmem:[%s356 + $0x278] sm:$0xff]
        %v494 = vld [vmem:[%s356 + $0x280] sm:$0xff]
        %v495 = vld [vmem:[%s356 + $0x288] sm:$0xff]
        %v496 = vld [vmem:[%s356 + $0x290] sm:$0xff]
        %v497 = vld [vmem:[%s356 + $0x298] sm:$0xff]
        %v498 = vld [vmem:[%s356 + $0x2a0] sm:$0xff]
        %v499 = vld [vmem:[%s356 + $0x2a8] sm:$0xff]
        %v500 = vld [vmem:[%s356 + $0x2b0] sm:$0xff]
        %v501 = vld [vmem:[%s356 + $0x2b8] sm:$0xff]
        %v502 = vld [vmem:[%s356 + $0x2c0] sm:$0xff]
        %v503 = vld [vmem:[%s356 + $0x2c8] sm:$0xff]
        %v504 = vld [vmem:[%s356 + $0x2d0] sm:$0xff]
        %v505 = vld [vmem:[%s356 + $0x2d8] sm:$0xff]
        %v506 = vld [vmem:[%s356 + $0x2e0] sm:$0xff]
        %v507 = vld [vmem:[%s356 + $0x2e8] sm:$0xff]
        %v508 = vld [vmem:[%s356 + $0x2f0] sm:$0xff]
        %v509 = vld [vmem:[%s356 + $0x2f8] sm:$0xff]
        %v510 = vld [vmem:[%s356 + $0x300] sm:$0xff]
        %v511 = vld [vmem:[%s356 + $0x308] sm:$0xff]
        %v512 = vld [vmem:[%s356 + $0x310] sm:$0xff]
        %v513 = vld [vmem:[%s356 + $0x318] sm:$0xff]
        %v514 = vld [vmem:[%s356 + $0x320] sm:$0xff]
        %v515 = vld [vmem:[%s356 + $0x328] sm:$0xff]
        %v516 = vld [vmem:[%s356 + $0x330] sm:$0xff]
        %v517 = vld [vmem:[%s356 + $0x338] sm:$0xff]
        %v518 = vld [vmem:[%s356 + $0x340] sm:$0xff]
        %v519 = vld [vmem:[%s356 + $0x348] sm:$0xff]
        %v520 = vld [vmem:[%s356 + $0x350] sm:$0xff]
        %v521 = vld [vmem:[%s356 + $0x358] sm:$0xff]
        %v522 = vld [vmem:[%s356 + $0x360] sm:$0xff]
        %v523 = vld [vmem:[%s356 + $0x368] sm:$0xff]
        %v524 = vld [vmem:[%s356 + $0x370] sm:$0xff]
        %v525 = vld [vmem:[%s356 + $0x378] sm:$0xff]
        %v526 = vld [vmem:[%s356 + $0x380] sm:$0xff]
        %v527 = vld [vmem:[%s356 + $0x388] sm:$0xff]
        %v528 = vld [vmem:[%s356 + $0x390] sm:$0xff]
        %v529 = vld [vmem:[%s356 + $0x398] sm:$0xff]
        %v530 = vld [vmem:[%s356 + $0x3a0] sm:$0xff]
        %v531 = vld [vmem:[%s356 + $0x3a8] sm:$0xff]
        %v532 = vld [vmem:[%s356 + $0x3b0] sm:$0xff]
        %v533 = vld [vmem:[%s356 + $0x3b8] sm:$0xff]
        %v534 = vld [vmem:[%s356 + $0x3c0] sm:$0xff]
        %v535 = vld [vmem:[%s356 + $0x3c8] sm:$0xff]
        %v536 = vld [vmem:[%s356 + $0x3d0] sm:$0xff]
        %v537 = vld [vmem:[%s356 + $0x3d8] sm:$0xff]
        %v538 = vld [vmem:[%s356 + $0x3e0] sm:$0xff]
        %v539 = vld [vmem:[%s356 + $0x3e8] sm:$0xff]
        %v540 = vld [vmem:[%s356 + $0x3f0] sm:$0xff]
        %v541 = vld [vmem:[%s356 + $0x3f8] sm:$0xff]
        %v542 = vld [vmem:[#allocation4] sm:$0xff]
        %v543 = vld [vmem:[#allocation4 + $0x8] sm:$0xff]
        %v544 = vld [vmem:[#allocation4 + $0x10] sm:$0xff]
        %v545 = vld [vmem:[#allocation4 + $0x18] sm:$0xff]
        %v546 = vld [vmem:[#allocation4 + $0x20] sm:$0xff]
        %v547 = vld [vmem:[#allocation4 + $0x28] sm:$0xff]
        %v548 = vld [vmem:[#allocation4 + $0x30] sm:$0xff]
        %v549 = vld [vmem:[#allocation4 + $0x38] sm:$0xff]
        %v550 = vld [vmem:[#allocation4 + $0x40] sm:$0xff]
        %v551 = vld [vmem:[#allocation4 + $0x48] sm:$0xff]
        %v552 = vld [vmem:[#allocation4 + $0x50] sm:$0xff]
        %v553 = vld [vmem:[#allocation4 + $0x58] sm:$0xff]
        %v554 = vld [vmem:[#allocation4 + $0x60] sm:$0xff]
        %v555 = vld [vmem:[#allocation4 + $0x68] sm:$0xff]
        %v556 = vld [vmem:[#allocation4 + $0x70] sm:$0xff]
        %v557 = vld [vmem:[#allocation4 + $0x78] sm:$0xff]
        %v558 = vld [vmem:[#allocation4 + $0x80] sm:$0xff]
        %v559 = vld [vmem:[#allocation4 + $0x88] sm:$0xff]
        %v560 = vld [vmem:[#allocation4 + $0x90] sm:$0xff]
        %v561 = vld [vmem:[#allocation4 + $0x98] sm:$0xff]
        %v562 = vld [vmem:[#allocation4 + $0xa0] sm:$0xff]
        %v563 = vld [vmem:[#allocation4 + $0xa8] sm:$0xff]
        %v564 = vld [vmem:[#allocation4 + $0xb0] sm:$0xff]
        %v565 = vld [vmem:[#allocation4 + $0xb8] sm:$0xff]
        %v566 = vld [vmem:[#allocation4 + $0xc0] sm:$0xff]
        %v567 = vld [vmem:[#allocation4 + $0xc8] sm:$0xff]
        %v568 = vld [vmem:[#allocation4 + $0xd0] sm:$0xff]
        %v569 = vld [vmem:[#allocation4 + $0xd8] sm:$0xff]
        %v570 = vld [vmem:[#allocation4 + $0xe0] sm:$0xff]
        %v571 = vld [vmem:[#allocation4 + $0xe8] sm:$0xff]
        %v572 = vld [vmem:[#allocation4 + $0xf0] sm:$0xff]
        %v573 = vld [vmem:[#allocation4 + $0xf8] sm:$0xff]
        %v574 = vld [vmem:[#allocation4 + $0x100] sm:$0xff]
        %v575 = vld [vmem:[#allocation4 + $0x108] sm:$0xff]
        %v576 = vld [vmem:[#allocation4 + $0x110] sm:$0xff]
        %v577 = vld [vmem:[#allocation4 + $0x118] sm:$0xff]
        %v578 = vld [vmem:[#allocation4 + $0x120] sm:$0xff]
        %v579 = vld [vmem:[#allocation4 + $0x128] sm:$0xff]
        %v580 = vld [vmem:[#allocation4 + $0x130] sm:$0xff]
        %v581 = vld [vmem:[#allocation4 + $0x138] sm:$0xff]
        %v582 = vld [vmem:[#allocation4 + $0x140] sm:$0xff]
        %v583 = vld [vmem:[#allocation4 + $0x148] sm:$0xff]
        %v584 = vld [vmem:[#allocation4 + $0x150] sm:$0xff]
        %v585 = vld [vmem:[#allocation4 + $0x158] sm:$0xff]
        %v586 = vld [vmem:[#allocation4 + $0x160] sm:$0xff]
        %v587 = vld [vmem:[#allocation4 + $0x168] sm:$0xff]
        %v588 = vld [vmem:[#allocation4 + $0x170] sm:$0xff]
        %v589 = vld [vmem:[#allocation4 + $0x178] sm:$0xff]
        %v590 = vld [vmem:[#allocation4 + $0x180] sm:$0xff]
        %v591 = vld [vmem:[#allocation4 + $0x188] sm:$0xff]
        %v592 = vld [vmem:[#allocation4 + $0x190] sm:$0xff]
        %v593 = vld [vmem:[#allocation4 + $0x198] sm:$0xff]
        %v594 = vld [vmem:[#allocation4 + $0x1a0] sm:$0xff]
        %v595 = vld [vmem:[#allocation4 + $0x1a8] sm:$0xff]
        %v596 = vld [vmem:[#allocation4 + $0x1b0] sm:$0xff]
        %v597 = vld [vmem:[#allocation4 + $0x1b8] sm:$0xff]
        %v598 = vld [vmem:[#allocation4 + $0x1c0] sm:$0xff]
        %v599 = vld [vmem:[#allocation4 + $0x1c8] sm:$0xff]
        %v600 = vld [vmem:[#allocation4 + $0x1d0] sm:$0xff]
        %v601 = vld [vmem:[#allocation4 + $0x1d8] sm:$0xff]
        %v602 = vld [vmem:[#allocation4 + $0x1e0] sm:$0xff]
        %v603 = vld [vmem:[#allocation4 + $0x1e8] sm:$0xff]
        %v604 = vld [vmem:[#allocation4 + $0x1f0] sm:$0xff]
        %v605 = vld [vmem:[#allocation4 + $0x1f8] sm:$0xff]
        %v606 = vld [vmem:[%s2] sm:$0x1]
        %v608 = vlaneseq
        %v609 = vshrl.u32 %v608, 7
        %v610 = vsub.s32 0, %v609
        %v611 = vrot.slane %v606, %v610
        %613 = vmatprep.subr.mxu0 0.0
        %614 = vmatpush1.msra.mxu0 %v542
        %615 = vmatprep.subr.mxu0 0.0
        %616 = vmatpush1.msra.mxu0 %v543
        %617 = vmatprep.subr.mxu0 0.0
        %618 = vmatpush1.msra.mxu0 %v544
        %619 = vmatprep.subr.mxu0 0.0
        %620 = vmatpush1.msra.mxu0 %v545
        %621 = vmatprep.subr.mxu0 0.0
        %622 = vmatpush1.msra.mxu0 %v546
        %623 = vmatprep.subr.mxu0 0.0
        %624 = vmatpush1.msra.mxu0 %v547
        %625 = vmatprep.subr.mxu0 0.0
        %626 = vmatpush1.msra.mxu0 %v548
        %627 = vmatprep.subr.mxu0 0.0
        %628 = vmatpush1.msra.mxu0 %v549
        %629 = vmatprep.subr.mxu0 0.0
        %630 = vmatpush1.msra.mxu0 %v550
        %631 = vmatprep.subr.mxu0 0.0
        %632 = vmatpush1.msra.mxu0 %v551
        %633 = vmatprep.subr.mxu0 0.0
        %634 = vmatpush1.msra.mxu0 %v552
        %635 = vmatprep.subr.mxu0 0.0
        %636 = vmatpush1.msra.mxu0 %v553
        %637 = vmatprep.subr.mxu0 0.0
        %638 = vmatpush1.msra.mxu0 %v554
        %639 = vmatprep.subr.mxu0 0.0
        %640 = vmatpush1.msra.mxu0 %v555
        %641 = vmatprep.subr.mxu0 0.0
        %642 = vmatpush1.msra.mxu0 %v556
        %643 = vmatprep.subr.mxu0 0.0
        %644 = vmatpush1.msra.mxu0 %v557
        %645 = vmatprep.subr.mxu0 0.0
        %646 = vmatpush1.msra.mxu0 %v558
        %647 = vmatprep.subr.mxu0 0.0
        %648 = vmatpush1.msra.mxu0 %v559
        %649 = vmatprep.subr.mxu0 0.0
        %650 = vmatpush1.msra.mxu0 %v560
        %651 = vmatprep.subr.mxu0 0.0
        %652 = vmatpush1.msra.mxu0 %v561
        %653 = vmatprep.subr.mxu0 0.0
        %654 = vmatpush1.msra.mxu0 %v562
        %655 = vmatprep.subr.mxu0 0.0
        %656 = vmatpush1.msra.mxu0 %v563
        %657 = vmatprep.subr.mxu0 0.0
        %658 = vmatpush1.msra.mxu0 %v564
        %659 = vmatprep.subr.mxu0 0.0
        %660 = vmatpush1.msra.mxu0 %v565
        %661 = vmatprep.subr.mxu0 0.0
        %662 = vmatpush1.msra.mxu0 %v566
        %663 = vmatprep.subr.mxu0 0.0
        %664 = vmatpush1.msra.mxu0 %v567
        %665 = vmatprep.subr.mxu0 0.0
        %666 = vmatpush1.msra.mxu0 %v568
        %667 = vmatprep.subr.mxu0 0.0
        %668 = vmatpush1.msra.mxu0 %v569
        %669 = vmatprep.subr.mxu0 0.0
        %670 = vmatpush1.msra.mxu0 %v570
        %671 = vmatprep.subr.mxu0 0.0
        %672 = vmatpush1.msra.mxu0 %v571
        %673 = vmatprep.subr.mxu0 0.0
        %674 = vmatpush1.msra.mxu0 %v572
        %675 = vmatprep.subr.mxu0 0.0
        %676 = vmatpush1.msra.mxu0 %v573
        %677 = vmatprep.mubr.f32.mxu0 %v415
        %678 = vmatmul.mubr.f32.gmra.mrb[0].mxu0 %v414
        %v679 = vpop.f32.mrb[0].mxu0
        %v680 = vadd.f32 %v611, %v679
        %v681 = vpop.f32.mrb[0].mxu0
        %682 = vmatprep.mubr.f32.mxu0 %v419
        %683 = vmatmul.mubr.f32.gmra.mrb[0].mxu0 %v418
        %v684 = vpop.f32.mrb[0].mxu0
        %v685 = vadd.f32 %v611, %v684
        %v686 = vpop.f32.mrb[0].mxu0
        %687 = vmatprep.mubr.f32.mxu0 %v423
        %688 = vmatmul.mubr.f32.gmra.mrb[0].mxu0 %v422
        %v689 = vpop.f32.mrb[0].mxu0
        %v690 = vadd.f32 %v611, %v689
        %v691 = vpop.f32.mrb[0].mxu0
        %692 = vmatprep.mubr.f32.mxu0 %v427
        %693 = vmatmul.mubr.f32.gmra.mrb[0].mxu0 %v426
        %v694 = vpop.f32.mrb[0].mxu0
        %v695 = vadd.f32 %v611, %v694
        %v696 = vpop.f32.mrb[0].mxu0
        %697 = vmatprep.mubr.f32.mxu0 %v431
        %698 = vmatmul.mubr.f32.gmra.mrb[0].mxu0 %v430
        %v699 = vpop.f32.mrb[0].mxu0
        %v700 = vadd.f32 %v611, %v699
        %v701 = vpop.f32.mrb[0].mxu0
        %702 = vmatprep.mubr.f32.mxu0 %v435
        %703 = vmatmul.mubr.f32.gmra.mrb[0].mxu0 %v434
        %v704 = vpop.f32.mrb[0].mxu0
        %v705 = vadd.f32 %v611, %v704
        %v706 = vpop.f32.mrb[0].mxu0
        %707 = vmatprep.mubr.f32.mxu0 %v439
        %708 = vmatmul.mubr.f32.gmra.mrb[0].mxu0 %v438
        %v709 = vpop.f32.mrb[0].mxu0
        %v710 = vadd.f32 %v611, %v709
        %v711 = vpop.f32.mrb[0].mxu0
        %712 = vmatprep.mubr.f32.mxu0 %v443
        %713 = vmatmul.mubr.f32.gmra.mrb[0].mxu0 %v442
        %v714 = vpop.f32.mrb[0].mxu0
        %v715 = vadd.f32 %v611, %v714
        %v716 = vpop.f32.mrb[0].mxu0
        %717 = vmatprep.mubr.f32.mxu0 %v447
        %718 = vmatmul.mubr.f32.gmra.mrb[0].mxu0 %v446
        %v719 = vpop.f32.mrb[0].mxu0
        %v720 = vadd.f32 %v611, %v719
        %v721 = vpop.f32.mrb[0].mxu0
        %722 = vmatprep.mubr.f32.mxu0 %v451
        %723 = vmatmul.mubr.f32.gmra.mrb[0].mxu0 %v450
        %v724 = vpop.f32.mrb[0].mxu0
        %v725 = vadd.f32 %v611, %v724
        %v726 = vpop.f32.mrb[0].mxu0
        %727 = vmatprep.mubr.f32.mxu0 %v455
        %728 = vmatmul.mubr.f32.gmra.mrb[0].mxu0 %v454
        %v729 = vpop.f32.mrb[0].mxu0
        %v730 = vadd.f32 %v611, %v729
        %v731 = vpop.f32.mrb[0].mxu0
        %732 = vmatprep.mubr.f32.mxu0 %v459
        %733 = vmatmul.mubr.f32.gmra.mrb[0].mxu0 %v458
        %v734 = vpop.f32.mrb[0].mxu0
        %v735 = vadd.f32 %v611, %v734
        %v736 = vpop.f32.mrb[0].mxu0
        %737 = vmatprep.mubr.f32.mxu0 %v463
        %738 = vmatmul.mubr.f32.gmra.mrb[0].mxu0 %v462
        %v739 = vpop.f32.mrb[0].mxu0
        %v740 = vadd.f32 %v611, %v739
        %v741 = vpop.f32.mrb[0].mxu0
        %742 = vmatprep.mubr.f32.mxu0 %v467
        %743 = vmatmul.mubr.f32.gmra.mrb[0].mxu0 %v466
        %v744 = vpop.f32.mrb[0].mxu0
        %v745 = vadd.f32 %v611, %v744
        %v746 = vpop.f32.mrb[0].mxu0
        %747 = vmatprep.mubr.f32.mxu0 %v471
        %748 = vmatmul.mubr.f32.gmra.mrb[0].mxu0 %v470
        %v749 = vpop.f32.mrb[0].mxu0
        %v750 = vadd.f32 %v611, %v749
        %v751 = vpop.f32.mrb[0].mxu0
        %752 = vmatprep.mubr.f32.mxu0 %v475
        %753 = vmatmul.mubr.f32.gmra.mrb[0].mxu0 %v474
        %v754 = vpop.f32.mrb[0].mxu0
        %v755 = vadd.f32 %v611, %v754
        %v756 = vpop.f32.mrb[0].mxu0
        %757 = vmatprep.mubr.f32.mxu0 %v479
        %758 = vmatmul.mubr.f32.gmra.mrb[0].mxu0 %v478
        %v759 = vpop.f32.mrb[0].mxu0
        %v760 = vadd.f32 %v611, %v759
        %v761 = vpop.f32.mrb[0].mxu0
        %762 = vmatprep.mubr.f32.mxu0 %v483
        %763 = vmatmul.mubr.f32.gmra.mrb[0].mxu0 %v482
        %v764 = vpop.f32.mrb[0].mxu0
        %v765 = vadd.f32 %v611, %v764
        %v766 = vpop.f32.mrb[0].mxu0
        %767 = vmatprep.mubr.f32.mxu0 %v487
        %768 = vmatmul.mubr.f32.gmra.mrb[0].mxu0 %v486
        %v769 = vpop.f32.mrb[0].mxu0
        %v770 = vadd.f32 %v611, %v769
        %v771 = vpop.f32.mrb[0].mxu0
        %772 = vmatprep.mubr.f32.mxu0 %v491
        %773 = vmatmul.mubr.f32.gmra.mrb[0].mxu0 %v490
        %v774 = vpop.f32.mrb[0].mxu0
        %v775 = vadd.f32 %v611, %v774
        %v776 = vpop.f32.mrb[0].mxu0
        %777 = vmatprep.mubr.f32.mxu0 %v495
        %778 = vmatmul.mubr.f32.gmra.mrb[0].mxu0 %v494
        %v779 = vpop.f32.mrb[0].mxu0
        %v780 = vadd.f32 %v611, %v779
        %v781 = vpop.f32.mrb[0].mxu0
        %782 = vmatprep.mubr.f32.mxu0 %v499
        %783 = vmatmul.mubr.f32.gmra.mrb[0].mxu0 %v498
        %v784 = vpop.f32.mrb[0].mxu0
        %v785 = vadd.f32 %v611, %v784
        %v786 = vpop.f32.mrb[0].mxu0
        %787 = vmatprep.mubr.f32.mxu0 %v503
        %788 = vmatmul.mubr.f32.gmra.mrb[0].mxu0 %v502
        %v789 = vpop.f32.mrb[0].mxu0
        %v790 = vadd.f32 %v611, %v789
        %v791 = vpop.f32.mrb[0].mxu0
        %792 = vmatprep.mubr.f32.mxu0 %v507
        %793 = vmatmul.mubr.f32.gmra.mrb[0].mxu0 %v506
        %v794 = vpop.f32.mrb[0].mxu0
        %v795 = vadd.f32 %v611, %v794
        %v796 = vpop.f32.mrb[0].mxu0
        %797 = vmatprep.mubr.f32.mxu0 %v511
        %798 = vmatmul.mubr.f32.gmra.mrb[0].mxu0 %v510
        %v799 = vpop.f32.mrb[0].mxu0
        %v800 = vadd.f32 %v611, %v799
        %v801 = vpop.f32.mrb[0].mxu0
        %802 = vmatprep.mubr.f32.mxu0 %v515
        %803 = vmatmul.mubr.f32.gmra.mrb[0].mxu0 %v514
        %v804 = vpop.f32.mrb[0].mxu0
        %v805 = vadd.f32 %v611, %v804
        %v806 = vpop.f32.mrb[0].mxu0
        %807 = vmatprep.mubr.f32.mxu0 %v519
        %808 = vmatmul.mubr.f32.gmra.mrb[0].mxu0 %v518
        %v809 = vpop.f32.mrb[0].mxu0
        %v810 = vadd.f32 %v611, %v809
        %v811 = vpop.f32.mrb[0].mxu0
        %812 = vmatprep.mubr.f32.mxu0 %v523
        %813 = vmatmul.mubr.f32.gmra.mrb[0].mxu0 %v522
        %v814 = vpop.f32.mrb[0].mxu0
        %v815 = vadd.f32 %v611, %v814
        %v816 = vpop.f32.mrb[0].mxu0
        %817 = vmatprep.mubr.f32.mxu0 %v527
        %818 = vmatmul.mubr.f32.gmra.mrb[0].mxu0 %v526
        %v819 = vpop.f32.mrb[0].mxu0
        %v820 = vadd.f32 %v611, %v819
        %v821 = vpop.f32.mrb[0].mxu0
        %822 = vmatprep.mubr.f32.mxu0 %v531
        %823 = vmatmul.mubr.f32.gmra.mrb[0].mxu0 %v530
        %v824 = vpop.f32.mrb[0].mxu0
        %v825 = vadd.f32 %v611, %v824
        %v826 = vpop.f32.mrb[0].mxu0
        %827 = vmatprep.mubr.f32.mxu0 %v535
        %828 = vmatmul.mubr.f32.gmra.mrb[0].mxu0 %v534
        %v829 = vpop.f32.mrb[0].mxu0
        %v830 = vadd.f32 %v611, %v829
        %v831 = vpop.f32.mrb[0].mxu0
        %832 = vmatprep.mubr.f32.mxu0 %v539
        %833 = vmatmul.mubr.f32.gmra.mrb[0].mxu0 %v538
        %v834 = vpop.f32.mrb[0].mxu0
        %v835 = vadd.f32 %v611, %v834
        %v836 = vpop.f32.mrb[0].mxu0
        %837 = vdwg.mxu0
        %838 = vmatprep.subr.mxu0 0.0
        %839 = vmatpush1.msra.mxu0 %v574
        %840 = vmatprep.subr.mxu0 0.0
        %841 = vmatpush1.msra.mxu0 %v575
        %842 = vmatprep.subr.mxu0 0.0
        %843 = vmatpush1.msra.mxu0 %v576
        %844 = vmatprep.subr.mxu0 0.0
        %845 = vmatpush1.msra.mxu0 %v577
        %846 = vmatprep.subr.mxu0 0.0
        %847 = vmatpush1.msra.mxu0 %v578
        %848 = vmatprep.subr.mxu0 0.0
        %849 = vmatpush1.msra.mxu0 %v579
        %850 = vmatprep.subr.mxu0 0.0
        %851 = vmatpush1.msra.mxu0 %v580
        %852 = vmatprep.subr.mxu0 0.0
        %853 = vmatpush1.msra.mxu0 %v581
        %854 = vmatprep.subr.mxu0 0.0
        %855 = vmatpush1.msra.mxu0 %v582
        %856 = vmatprep.subr.mxu0 0.0
        %857 = vmatpush1.msra.mxu0 %v583
        %858 = vmatprep.subr.mxu0 0.0
        %859 = vmatpush1.msra.mxu0 %v584
        %860 = vmatprep.subr.mxu0 0.0
        %861 = vmatpush1.msra.mxu0 %v585
        %862 = vmatprep.subr.mxu0 0.0
        %863 = vmatpush1.msra.mxu0 %v586
        %864 = vmatprep.subr.mxu0 0.0
        %865 = vmatpush1.msra.mxu0 %v587
        %866 = vmatprep.subr.mxu0 0.0
        %867 = vmatpush1.msra.mxu0 %v588
        %868 = vmatprep.subr.mxu0 0.0
        %869 = vmatpush1.msra.mxu0 %v589
        %870 = vmatprep.subr.mxu0 0.0
        %871 = vmatpush1.msra.mxu0 %v590
        %872 = vmatprep.subr.mxu0 0.0
        %873 = vmatpush1.msra.mxu0 %v591
        %874 = vmatprep.subr.mxu0 0.0
        %875 = vmatpush1.msra.mxu0 %v592
        %876 = vmatprep.subr.mxu0 0.0
        %877 = vmatpush1.msra.mxu0 %v593
        %878 = vmatprep.subr.mxu0 0.0
        %879 = vmatpush1.msra.mxu0 %v594
        %880 = vmatprep.subr.mxu0 0.0
        %881 = vmatpush1.msra.mxu0 %v595
        %882 = vmatprep.subr.mxu0 0.0
        %883 = vmatpush1.msra.mxu0 %v596
        %884 = vmatprep.subr.mxu0 0.0
        %885 = vmatpush1.msra.mxu0 %v597
        %886 = vmatprep.subr.mxu0 0.0
        %887 = vmatpush1.msra.mxu0 %v598
        %888 = vmatprep.subr.mxu0 0.0
        %889 = vmatpush1.msra.mxu0 %v599
        %890 = vmatprep.subr.mxu0 0.0
        %891 = vmatpush1.msra.mxu0 %v600
        %892 = vmatprep.subr.mxu0 0.0
        %893 = vmatpush1.msra.mxu0 %v601
        %894 = vmatprep.subr.mxu0 0.0
        %895 = vmatpush1.msra.mxu0 %v602
        %896 = vmatprep.subr.mxu0 0.0
        %897 = vmatpush1.msra.mxu0 %v603
        %898 = vmatprep.subr.mxu0 0.0
        %899 = vmatpush1.msra.mxu0 %v604
        %900 = vmatprep.subr.mxu0 0.0
        %901 = vmatpush1.msra.mxu0 %v605
        %902 = vmatprep.mubr.f32.mxu0 %v417
        %903 = vmatmul.mubr.f32.gmra.mrb[0].mxu0 %v416
        %v904 = vpop.f32.mrb[0].mxu0
        %v905 = vadd.f32 %v680, %v904
        %v906 = vpop.f32.mrb[0].mxu0
        %907 = vmatprep.mubr.f32.mxu0 %v421
        %908 = vmatmul.mubr.f32.gmra.mrb[0].mxu0 %v420
        %v909 = vpop.f32.mrb[0].mxu0
        %v910 = vadd.f32 %v685, %v909
        %v911 = vpop.f32.mrb[0].mxu0
        %912 = vmatprep.mubr.f32.mxu0 %v425
        %913 = vmatmul.mubr.f32.gmra.mrb[0].mxu0 %v424
        %v914 = vpop.f32.mrb[0].mxu0
        %v915 = vadd.f32 %v690, %v914
        %v916 = vpop.f32.mrb[0].mxu0
        %917 = vmatprep.mubr.f32.mxu0 %v429
        %918 = vmatmul.mubr.f32.gmra.mrb[0].mxu0 %v428
        %v919 = vpop.f32.mrb[0].mxu0
        %v920 = vadd.f32 %v695, %v919
        %v921 = vpop.f32.mrb[0].mxu0
        %922 = vmatprep.mubr.f32.mxu0 %v433
        %923 = vmatmul.mubr.f32.gmra.mrb[0].mxu0 %v432
        %v924 = vpop.f32.mrb[0].mxu0
        %v925 = vadd.f32 %v700, %v924
        %v926 = vpop.f32.mrb[0].mxu0
        %927 = vmatprep.mubr.f32.mxu0 %v437
        %928 = vmatmul.mubr.f32.gmra.mrb[0].mxu0 %v436
        %v929 = vpop.f32.mrb[0].mxu0
        %v930 = vadd.f32 %v705, %v929
        %v931 = vpop.f32.mrb[0].mxu0
        %932 = vmatprep.mubr.f32.mxu0 %v441
        %933 = vmatmul.mubr.f32.gmra.mrb[0].mxu0 %v440
        %v934 = vpop.f32.mrb[0].mxu0
        %v935 = vadd.f32 %v710, %v934
        %v936 = vpop.f32.mrb[0].mxu0
        %937 = vmatprep.mubr.f32.mxu0 %v445
        %938 = vmatmul.mubr.f32.gmra.mrb[0].mxu0 %v444
        %v939 = vpop.f32.mrb[0].mxu0
        %v940 = vadd.f32 %v715, %v939
        %v941 = vpop.f32.mrb[0].mxu0
        %942 = vmatprep.mubr.f32.mxu0 %v449
        %943 = vmatmul.mubr.f32.gmra.mrb[0].mxu0 %v448
        %v944 = vpop.f32.mrb[0].mxu0
        %v945 = vadd.f32 %v720, %v944
        %v946 = vpop.f32.mrb[0].mxu0
        %947 = vmatprep.mubr.f32.mxu0 %v453
        %948 = vmatmul.mubr.f32.gmra.mrb[0].mxu0 %v452
        %v949 = vpop.f32.mrb[0].mxu0
        %v950 = vadd.f32 %v725, %v949
        %v951 = vpop.f32.mrb[0].mxu0
        %952 = vmatprep.mubr.f32.mxu0 %v457
        %953 = vmatmul.mubr.f32.gmra.mrb[0].mxu0 %v456
        %v954 = vpop.f32.mrb[0].mxu0
        %v955 = vadd.f32 %v730, %v954
        %v956 = vpop.f32.mrb[0].mxu0
        %957 = vmatprep.mubr.f32.mxu0 %v461
        %958 = vmatmul.mubr.f32.gmra.mrb[0].mxu0 %v460
        %v959 = vpop.f32.mrb[0].mxu0
        %v960 = vadd.f32 %v735, %v959
        %v961 = vpop.f32.mrb[0].mxu0
        %962 = vmatprep.mubr.f32.mxu0 %v465
        %963 = vmatmul.mubr.f32.gmra.mrb[0].mxu0 %v464
        %v964 = vpop.f32.mrb[0].mxu0
        %v965 = vadd.f32 %v740, %v964
        %v966 = vpop.f32.mrb[0].mxu0
        %967 = vmatprep.mubr.f32.mxu0 %v469
        %968 = vmatmul.mubr.f32.gmra.mrb[0].mxu0 %v468
        %v969 = vpop.f32.mrb[0].mxu0
        %v970 = vadd.f32 %v745, %v969
        %v971 = vpop.f32.mrb[0].mxu0
        %972 = vmatprep.mubr.f32.mxu0 %v473
        %973 = vmatmul.mubr.f32.gmra.mrb[0].mxu0 %v472
        %v974 = vpop.f32.mrb[0].mxu0
        %v975 = vadd.f32 %v750, %v974
        %v976 = vpop.f32.mrb[0].mxu0
        %977 = vmatprep.mubr.f32.mxu0 %v477
        %978 = vmatmul.mubr.f32.gmra.mrb[0].mxu0 %v476
        %v979 = vpop.f32.mrb[0].mxu0
        %v980 = vadd.f32 %v755, %v979
        %v981 = vpop.f32.mrb[0].mxu0
        %982 = vmatprep.mubr.f32.mxu0 %v481
        %983 = vmatmul.mubr.f32.gmra.mrb[0].mxu0 %v480
        %v984 = vpop.f32.mrb[0].mxu0
        %v985 = vadd.f32 %v760, %v984
        %v986 = vpop.f32.mrb[0].mxu0
        %987 = vmatprep.mubr.f32.mxu0 %v485
        %988 = vmatmul.mubr.f32.gmra.mrb[0].mxu0 %v484
        %v989 = vpop.f32.mrb[0].mxu0
        %v990 = vadd.f32 %v765, %v989
        %v991 = vpop.f32.mrb[0].mxu0
        %992 = vmatprep.mubr.f32.mxu0 %v489
        %993 = vmatmul.mubr.f32.gmra.mrb[0].mxu0 %v488
        %v994 = vpop.f32.mrb[0].mxu0
        %v995 = vadd.f32 %v770, %v994
        %v996 = vpop.f32.mrb[0].mxu0
        %997 = vmatprep.mubr.f32.mxu0 %v493
        %998 = vmatmul.mubr.f32.gmra.mrb[0].mxu0 %v492
        %v999 = vpop.f32.mrb[0].mxu0
        %v1000 = vadd.f32 %v775, %v999
        %v1001 = vpop.f32.mrb[0].mxu0
        %1002 = vmatprep.mubr.f32.mxu0 %v497
        %1003 = vmatmul.mubr.f32.gmra.mrb[0].mxu0 %v496
        %v1004 = vpop.f32.mrb[0].mxu0
        %v1005 = vadd.f32 %v780, %v1004
        %v1006 = vpop.f32.mrb[0].mxu0
        %1007 = vmatprep.mubr.f32.mxu0 %v501
        %1008 = vmatmul.mubr.f32.gmra.mrb[0].mxu0 %v500
        %v1009 = vpop.f32.mrb[0].mxu0
        %v1010 = vadd.f32 %v785, %v1009
        %v1011 = vpop.f32.mrb[0].mxu0
        %1012 = vmatprep.mubr.f32.mxu0 %v505
        %1013 = vmatmul.mubr.f32.gmra.mrb[0].mxu0 %v504
        %v1014 = vpop.f32.mrb[0].mxu0
        %v1015 = vadd.f32 %v790, %v1014
        %v1016 = vpop.f32.mrb[0].mxu0
        %1017 = vmatprep.mubr.f32.mxu0 %v509
        %1018 = vmatmul.mubr.f32.gmra.mrb[0].mxu0 %v508
        %v1019 = vpop.f32.mrb[0].mxu0
        %v1020 = vadd.f32 %v795, %v1019
        %v1021 = vpop.f32.mrb[0].mxu0
        %1022 = vmatprep.mubr.f32.mxu0 %v513
        %1023 = vmatmul.mubr.f32.gmra.mrb[0].mxu0 %v512
        %v1024 = vpop.f32.mrb[0].mxu0
        %v1025 = vadd.f32 %v800, %v1024
        %v1026 = vpop.f32.mrb[0].mxu0
        %1027 = vmatprep.mubr.f32.mxu0 %v517
        %1028 = vmatmul.mubr.f32.gmra.mrb[0].mxu0 %v516
        %v1029 = vpop.f32.mrb[0].mxu0
        %v1030 = vadd.f32 %v805, %v1029
        %v1031 = vpop.f32.mrb[0].mxu0
        %1032 = vmatprep.mubr.f32.mxu0 %v521
        %1033 = vmatmul.mubr.f32.gmra.mrb[0].mxu0 %v520
        %v1034 = vpop.f32.mrb[0].mxu0
        %v1035 = vadd.f32 %v810, %v1034
        %v1036 = vpop.f32.mrb[0].mxu0
        %1037 = vmatprep.mubr.f32.mxu0 %v525
        %1038 = vmatmul.mubr.f32.gmra.mrb[0].mxu0 %v524
        %v1039 = vpop.f32.mrb[0].mxu0
        %v1040 = vadd.f32 %v815, %v1039
        %v1041 = vpop.f32.mrb[0].mxu0
        %1042 = vmatprep.mubr.f32.mxu0 %v529
        %1043 = vmatmul.mubr.f32.gmra.mrb[0].mxu0 %v528
        %v1044 = vpop.f32.mrb[0].mxu0
        %v1045 = vadd.f32 %v820, %v1044
        %v1046 = vpop.f32.mrb[0].mxu0
        %1047 = vmatprep.mubr.f32.mxu0 %v533
        %1048 = vmatmul.mubr.f32.gmra.mrb[0].mxu0 %v532
        %v1049 = vpop.f32.mrb[0].mxu0
        %v1050 = vadd.f32 %v825, %v1049
        %v1051 = vpop.f32.mrb[0].mxu0
        %1052 = vmatprep.mubr.f32.mxu0 %v537
        %1053 = vmatmul.mubr.f32.gmra.mrb[0].mxu0 %v536
        %v1054 = vpop.f32.mrb[0].mxu0
        %v1055 = vadd.f32 %v830, %v1054
        %v1056 = vpop.f32.mrb[0].mxu0
        %1057 = vmatprep.mubr.f32.mxu0 %v541
        %1058 = vmatmul.mubr.f32.gmra.mrb[0].mxu0 %v540
        %v1059 = vpop.f32.mrb[0].mxu0
        %v1060 = vadd.f32 %v835, %v1059
        %v1061 = vpop.f32.mrb[0].mxu0
        %1062 = vdwg.mxu0
        %v1063 = vmax.f32 %v905, 0.0
        %v1064 = vmax.f32 %v910, 0.0
        %v1065 = vmax.f32 %v915, 0.0
        %v1066 = vmax.f32 %v920, 0.0
        %v1067 = vmax.f32 %v925, 0.0
        %v1068 = vmax.f32 %v930, 0.0
        %v1069 = vmax.f32 %v935, 0.0
        %v1070 = vmax.f32 %v940, 0.0
        %v1071 = vmax.f32 %v945, 0.0
        %v1072 = vmax.f32 %v950, 0.0
        %v1073 = vmax.f32 %v955, 0.0
        %v1074 = vmax.f32 %v960, 0.0
        %v1075 = vmax.f32 %v965, 0.0
        %v1076 = vmax.f32 %v970, 0.0
        %v1077 = vmax.f32 %v975, 0.0
        %v1078 = vmax.f32 %v980, 0.0
        %v1079 = vmax.f32 %v985, 0.0
        %v1080 = vmax.f32 %v990, 0.0
        %v1081 = vmax.f32 %v995, 0.0
        %v1082 = vmax.f32 %v1000, 0.0
        %v1083 = vmax.f32 %v1005, 0.0
        %v1084 = vmax.f32 %v1010, 0.0
        %v1085 = vmax.f32 %v1015, 0.0
        %v1086 = vmax.f32 %v1020, 0.0
        %v1087 = vmax.f32 %v1025, 0.0
        %v1088 = vmax.f32 %v1030, 0.0
        %v1089 = vmax.f32 %v1035, 0.0
        %v1090 = vmax.f32 %v1040, 0.0
        %v1091 = vmax.f32 %v1045, 0.0
        %v1092 = vmax.f32 %v1050, 0.0
        %v1093 = vmax.f32 %v1055, 0.0
        %v1094 = vmax.f32 %v1060, 0.0
        %v1095 = vld [vmem:[#allocation6] sm:$0xff]
        %v1096 = vld [vmem:[#allocation6 + $0x8] sm:$0xff]
        %v1097 = vld [vmem:[#allocation6 + $0x10] sm:$0xff]
        %v1098 = vld [vmem:[#allocation6 + $0x18] sm:$0xff]
        %v1099 = vld [vmem:[#allocation6 + $0x20] sm:$0xff]
        %v1100 = vld [vmem:[#allocation6 + $0x28] sm:$0xff]
        %v1101 = vld [vmem:[#allocation6 + $0x30] sm:$0xff]
        %v1102 = vld [vmem:[#allocation6 + $0x38] sm:$0xff]
        %v1103 = vld [vmem:[#allocation6 + $0x40] sm:$0xff]
        %v1104 = vld [vmem:[#allocation6 + $0x48] sm:$0xff]
        %v1105 = vld [vmem:[#allocation6 + $0x50] sm:$0xff]
        %v1106 = vld [vmem:[#allocation6 + $0x58] sm:$0xff]
        %v1107 = vld [vmem:[#allocation6 + $0x60] sm:$0xff]
        %v1108 = vld [vmem:[#allocation6 + $0x68] sm:$0xff]
        %v1109 = vld [vmem:[#allocation6 + $0x70] sm:$0xff]
        %v1110 = vld [vmem:[#allocation6 + $0x78] sm:$0xff]
        %v1111 = vld [vmem:[%s4] sm:$0x1]
        %v1113 = vlaneseq
        %v1114 = vshrl.u32 %v1113, 7
        %v1115 = vsub.s32 0, %v1114
        %v1116 = vrot.slane %v1111, %v1115
        %1118 = vmatprep.subr.mxu0 0.0
        %1119 = vmatpush1.msra.mxu0 %v1095
        %1120 = vmatprep.subr.mxu0 0.0
        %1121 = vmatpush1.msra.mxu0 %v1096
        %1122 = vmatprep.subr.mxu0 0.0
        %1123 = vmatpush1.msra.mxu0 %v1097
        %1124 = vmatprep.subr.mxu0 0.0
        %1125 = vmatpush1.msra.mxu0 %v1098
        %1126 = vmatprep.subr.mxu0 0.0
        %1127 = vmatpush1.msra.mxu0 %v1099
        %1128 = vmatprep.subr.mxu0 0.0
        %1129 = vmatpush1.msra.mxu0 %v1100
        %1130 = vmatprep.subr.mxu0 0.0
        %1131 = vmatpush1.msra.mxu0 %v1101
        %1132 = vmatprep.subr.mxu0 0.0
        %1133 = vmatpush1.msra.mxu0 %v1102
        %1134 = vmatprep.subr.mxu0 0.0
        %1135 = vmatpush1.msra.mxu0 %v1103
        %1136 = vmatprep.subr.mxu0 0.0
        %1137 = vmatpush1.msra.mxu0 %v1104
        %1138 = vmatprep.subr.mxu0 0.0
        %1139 = vmatpush1.msra.mxu0 %v1105
        %1140 = vmatprep.subr.mxu0 0.0
        %1141 = vmatpush1.msra.mxu0 %v1106
        %1142 = vmatprep.subr.mxu0 0.0
        %1143 = vmatpush1.msra.mxu0 %v1107
        %1144 = vmatprep.subr.mxu0 0.0
        %1145 = vmatpush1.msra.mxu0 %v1108
        %1146 = vmatprep.subr.mxu0 0.0
        %1147 = vmatpush1.msra.mxu0 %v1109
        %1148 = vmatprep.subr.mxu0 0.0
        %1149 = vmatpush1.msra.mxu0 %v1110
        %1150 = vmatprep.subr.mxu0 0.0
        %1151 = vmatpush1.msra.mxu0 0.0
        %1152 = vmatprep.subr.mxu0 0.0
        %1153 = vmatpush1.msra.mxu0 0.0
        %1154 = vmatprep.subr.mxu0 0.0
        %1155 = vmatpush1.msra.mxu0 0.0
        %1156 = vmatprep.subr.mxu0 0.0
        %1157 = vmatpush1.msra.mxu0 0.0
        %1158 = vmatprep.subr.mxu0 0.0
        %1159 = vmatpush1.msra.mxu0 0.0
        %1160 = vmatprep.subr.mxu0 0.0
        %1161 = vmatpush1.msra.mxu0 0.0
        %1162 = vmatprep.subr.mxu0 0.0
        %1163 = vmatpush1.msra.mxu0 0.0
        %1164 = vmatprep.subr.mxu0 0.0
        %1165 = vmatpush1.msra.mxu0 0.0
        %1166 = vmatprep.subr.mxu0 0.0
        %1167 = vmatpush1.msra.mxu0 0.0
        %1168 = vmatprep.subr.mxu0 0.0
        %1169 = vmatpush1.msra.mxu0 0.0
        %1170 = vmatprep.subr.mxu0 0.0
        %1171 = vmatpush1.msra.mxu0 0.0
        %1172 = vmatprep.subr.mxu0 0.0
        %1173 = vmatpush1.msra.mxu0 0.0
        %1174 = vmatprep.subr.mxu0 0.0
        %1175 = vmatpush1.msra.mxu0 0.0
        %1176 = vmatprep.subr.mxu0 0.0
        %1177 = vmatpush1.msra.mxu0 0.0
        %1178 = vmatprep.subr.mxu0 0.0
        %1179 = vmatpush1.msra.mxu0 0.0
        %1180 = vmatprep.subr.mxu0 0.0
        %1181 = vmatpush1.msra.mxu0 0.0
        %1182 = vmatprep.mubr.f32.mxu0 0.0
        %1183 = vmatmul.mubr.f32.gmra.mrb[0].mxu0 %v1063
        %v1184 = vpop.f32.mrb[0].mxu0
        %v1185 = vadd.f32 %v1116, %v1184
        %v1186 = vpop.f32.mrb[0].mxu0
        %1187 = vmatprep.mubr.f32.mxu0 0.0
        %1188 = vmatmul.mubr.f32.gmra.mrb[0].mxu0 %v1064
        %v1189 = vpop.f32.mrb[0].mxu0
        %v1190 = vadd.f32 %v1116, %v1189
        %v1191 = vpop.f32.mrb[0].mxu0
        %1192 = vmatprep.mubr.f32.mxu0 0.0
        %1193 = vmatmul.mubr.f32.gmra.mrb[0].mxu0 %v1065
        %v1194 = vpop.f32.mrb[0].mxu0
        %v1195 = vadd.f32 %v1116, %v1194
        %v1196 = vpop.f32.mrb[0].mxu0
        %1197 = vmatprep.mubr.f32.mxu0 0.0
        %1198 = vmatmul.mubr.f32.gmra.mrb[0].mxu0 %v1066
        %v1199 = vpop.f32.mrb[0].mxu0
        %v1200 = vadd.f32 %v1116, %v1199
        %v1201 = vpop.f32.mrb[0].mxu0
        %1202 = vmatprep.mubr.f32.mxu0 0.0
        %1203 = vmatmul.mubr.f32.gmra.mrb[0].mxu0 %v1067
        %v1204 = vpop.f32.mrb[0].mxu0
        %v1205 = vadd.f32 %v1116, %v1204
        %v1206 = vpop.f32.mrb[0].mxu0
        %1207 = vmatprep.mubr.f32.mxu0 0.0
        %1208 = vmatmul.mubr.f32.gmra.mrb[0].mxu0 %v1068
        %v1209 = vpop.f32.mrb[0].mxu0
        %v1210 = vadd.f32 %v1116, %v1209
        %v1211 = vpop.f32.mrb[0].mxu0
        %1212 = vmatprep.mubr.f32.mxu0 0.0
        %1213 = vmatmul.mubr.f32.gmra.mrb[0].mxu0 %v1069
        %v1214 = vpop.f32.mrb[0].mxu0
        %v1215 = vadd.f32 %v1116, %v1214
        %v1216 = vpop.f32.mrb[0].mxu0
        %1217 = vmatprep.mubr.f32.mxu0 0.0
        %1218 = vmatmul.mubr.f32.gmra.mrb[0].mxu0 %v1070
        %v1219 = vpop.f32.mrb[0].mxu0
        %v1220 = vadd.f32 %v1116, %v1219
        %v1221 = vpop.f32.mrb[0].mxu0
        %1222 = vmatprep.mubr.f32.mxu0 0.0
        %1223 = vmatmul.mubr.f32.gmra.mrb[0].mxu0 %v1071
        %v1224 = vpop.f32.mrb[0].mxu0
        %v1225 = vadd.f32 %v1116, %v1224
        %v1226 = vpop.f32.mrb[0].mxu0
        %1227 = vmatprep.mubr.f32.mxu0 0.0
        %1228 = vmatmul.mubr.f32.gmra.mrb[0].mxu0 %v1072
        %v1229 = vpop.f32.mrb[0].mxu0
        %v1230 = vadd.f32 %v1116, %v1229
        %v1231 = vpop.f32.mrb[0].mxu0
        %1232 = vmatprep.mubr.f32.mxu0 0.0
        %1233 = vmatmul.mubr.f32.gmra.mrb[0].mxu0 %v1073
        %v1234 = vpop.f32.mrb[0].mxu0
        %v1235 = vadd.f32 %v1116, %v1234
        %v1236 = vpop.f32.mrb[0].mxu0
        %1237 = vmatprep.mubr.f32.mxu0 0.0
        %1238 = vmatmul.mubr.f32.gmra.mrb[0].mxu0 %v1074
        %v1239 = vpop.f32.mrb[0].mxu0
        %v1240 = vadd.f32 %v1116, %v1239
        %v1241 = vpop.f32.mrb[0].mxu0
        %1242 = vmatprep.mubr.f32.mxu0 0.0
        %1243 = vmatmul.mubr.f32.gmra.mrb[0].mxu0 %v1075
        %v1244 = vpop.f32.mrb[0].mxu0
        %v1245 = vadd.f32 %v1116, %v1244
        %v1246 = vpop.f32.mrb[0].mxu0
        %1247 = vmatprep.mubr.f32.mxu0 0.0
        %1248 = vmatmul.mubr.f32.gmra.mrb[0].mxu0 %v1076
        %v1249 = vpop.f32.mrb[0].mxu0
        %v1250 = vadd.f32 %v1116, %v1249
        %v1251 = vpop.f32.mrb[0].mxu0
        %1252 = vmatprep.mubr.f32.mxu0 0.0
        %1253 = vmatmul.mubr.f32.gmra.mrb[0].mxu0 %v1077
        %v1254 = vpop.f32.mrb[0].mxu0
        %v1255 = vadd.f32 %v1116, %v1254
        %v1256 = vpop.f32.mrb[0].mxu0
        %1257 = vmatprep.mubr.f32.mxu0 0.0
        %1258 = vmatmul.mubr.f32.gmra.mrb[0].mxu0 %v1078
        %v1259 = vpop.f32.mrb[0].mxu0
        %v1260 = vadd.f32 %v1116, %v1259
        %v1261 = vpop.f32.mrb[0].mxu0
        %1262 = vmatprep.mubr.f32.mxu0 0.0
        %1263 = vmatmul.mubr.f32.gmra.mrb[0].mxu0 %v1079
        %v1264 = vpop.f32.mrb[0].mxu0
        %v1265 = vadd.f32 %v1116, %v1264
        %v1266 = vpop.f32.mrb[0].mxu0
        %1267 = vmatprep.mubr.f32.mxu0 0.0
        %1268 = vmatmul.mubr.f32.gmra.mrb[0].mxu0 %v1080
        %v1269 = vpop.f32.mrb[0].mxu0
        %v1270 = vadd.f32 %v1116, %v1269
        %v1271 = vpop.f32.mrb[0].mxu0
        %1272 = vmatprep.mubr.f32.mxu0 0.0
        %1273 = vmatmul.mubr.f32.gmra.mrb[0].mxu0 %v1081
        %v1274 = vpop.f32.mrb[0].mxu0
        %v1275 = vadd.f32 %v1116, %v1274
        %v1276 = vpop.f32.mrb[0].mxu0
        %1277 = vmatprep.mubr.f32.mxu0 0.0
        %1278 = vmatmul.mubr.f32.gmra.mrb[0].mxu0 %v1082
        %v1279 = vpop.f32.mrb[0].mxu0
        %v1280 = vadd.f32 %v1116, %v1279
        %v1281 = vpop.f32.mrb[0].mxu0
        %1282 = vmatprep.mubr.f32.mxu0 0.0
        %1283 = vmatmul.mubr.f32.gmra.mrb[0].mxu0 %v1083
        %v1284 = vpop.f32.mrb[0].mxu0
        %v1285 = vadd.f32 %v1116, %v1284
        %v1286 = vpop.f32.mrb[0].mxu0
        %1287 = vmatprep.mubr.f32.mxu0 0.0
        %1288 = vmatmul.mubr.f32.gmra.mrb[0].mxu0 %v1084
        %v1289 = vpop.f32.mrb[0].mxu0
        %v1290 = vadd.f32 %v1116, %v1289
        %v1291 = vpop.f32.mrb[0].mxu0
        %1292 = vmatprep.mubr.f32.mxu0 0.0
        %1293 = vmatmul.mubr.f32.gmra.mrb[0].mxu0 %v1085
        %v1294 = vpop.f32.mrb[0].mxu0
        %v1295 = vadd.f32 %v1116, %v1294
        %v1296 = vpop.f32.mrb[0].mxu0
        %1297 = vmatprep.mubr.f32.mxu0 0.0
        %1298 = vmatmul.mubr.f32.gmra.mrb[0].mxu0 %v1086
        %v1299 = vpop.f32.mrb[0].mxu0
        %v1300 = vadd.f32 %v1116, %v1299
        %v1301 = vpop.f32.mrb[0].mxu0
        %1302 = vmatprep.mubr.f32.mxu0 0.0
        %1303 = vmatmul.mubr.f32.gmra.mrb[0].mxu0 %v1087
        %v1304 = vpop.f32.mrb[0].mxu0
        %v1305 = vadd.f32 %v1116, %v1304
        %v1306 = vpop.f32.mrb[0].mxu0
        %1307 = vmatprep.mubr.f32.mxu0 0.0
        %1308 = vmatmul.mubr.f32.gmra.mrb[0].mxu0 %v1088
        %v1309 = vpop.f32.mrb[0].mxu0
        %v1310 = vadd.f32 %v1116, %v1309
        %v1311 = vpop.f32.mrb[0].mxu0
        %1312 = vmatprep.mubr.f32.mxu0 0.0
        %1313 = vmatmul.mubr.f32.gmra.mrb[0].mxu0 %v1089
        %v1314 = vpop.f32.mrb[0].mxu0
        %v1315 = vadd.f32 %v1116, %v1314
        %v1316 = vpop.f32.mrb[0].mxu0
        %1317 = vmatprep.mubr.f32.mxu0 0.0
        %1318 = vmatmul.mubr.f32.gmra.mrb[0].mxu0 %v1090
        %v1319 = vpop.f32.mrb[0].mxu0
        %v1320 = vadd.f32 %v1116, %v1319
        %v1321 = vpop.f32.mrb[0].mxu0
        %1322 = vmatprep.mubr.f32.mxu0 0.0
        %1323 = vmatmul.mubr.f32.gmra.mrb[0].mxu0 %v1091
        %v1324 = vpop.f32.mrb[0].mxu0
        %v1325 = vadd.f32 %v1116, %v1324
        %v1326 = vpop.f32.mrb[0].mxu0
        %1327 = vmatprep.mubr.f32.mxu0 0.0
        %1328 = vmatmul.mubr.f32.gmra.mrb[0].mxu0 %v1092
        %v1329 = vpop.f32.mrb[0].mxu0
        %v1330 = vadd.f32 %v1116, %v1329
        %v1331 = vpop.f32.mrb[0].mxu0
        %1332 = vmatprep.mubr.f32.mxu0 0.0
        %1333 = vmatmul.mubr.f32.gmra.mrb[0].mxu0 %v1093
        %v1334 = vpop.f32.mrb[0].mxu0
        %v1335 = vadd.f32 %v1116, %v1334
        %v1336 = vpop.f32.mrb[0].mxu0
        %1337 = vmatprep.mubr.f32.mxu0 0.0
        %1338 = vmatmul.mubr.f32.gmra.mrb[0].mxu0 %v1094
        %v1339 = vpop.f32.mrb[0].mxu0
        %v1340 = vadd.f32 %v1116, %v1339
        %v1341 = vpop.f32.mrb[0].mxu0
        %1342 = vdwg.mxu0
        %v1343 = vmax.f32 %v1185, 0.0
        %v1344 = vmax.f32 %v1190, 0.0
        %v1345 = vmax.f32 %v1195, 0.0
        %v1346 = vmax.f32 %v1200, 0.0
        %v1347 = vmax.f32 %v1205, 0.0
        %v1348 = vmax.f32 %v1210, 0.0
        %v1349 = vmax.f32 %v1215, 0.0
        %v1350 = vmax.f32 %v1220, 0.0
        %v1351 = vmax.f32 %v1225, 0.0
        %v1352 = vmax.f32 %v1230, 0.0
        %v1353 = vmax.f32 %v1235, 0.0
        %v1354 = vmax.f32 %v1240, 0.0
        %v1355 = vmax.f32 %v1245, 0.0
        %v1356 = vmax.f32 %v1250, 0.0
        %v1357 = vmax.f32 %v1255, 0.0
        %v1358 = vmax.f32 %v1260, 0.0
        %v1359 = vmax.f32 %v1265, 0.0
        %v1360 = vmax.f32 %v1270, 0.0
        %v1361 = vmax.f32 %v1275, 0.0
        %v1362 = vmax.f32 %v1280, 0.0
        %v1363 = vmax.f32 %v1285, 0.0
        %v1364 = vmax.f32 %v1290, 0.0
        %v1365 = vmax.f32 %v1295, 0.0
        %v1366 = vmax.f32 %v1300, 0.0
        %v1367 = vmax.f32 %v1305, 0.0
        %v1368 = vmax.f32 %v1310, 0.0
        %v1369 = vmax.f32 %v1315, 0.0
        %v1370 = vmax.f32 %v1320, 0.0
        %v1371 = vmax.f32 %v1325, 0.0
        %v1372 = vmax.f32 %v1330, 0.0
        %v1373 = vmax.f32 %v1335, 0.0
        %v1374 = vmax.f32 %v1340, 0.0
        %v1375 = vld [vmem:[#allocation7] sm:$0xff]
        %v1376 = vld [vmem:[#allocation7 + $0x8] sm:$0xff]
        %v1377 = vld [vmem:[#allocation7 + $0x10] sm:$0xff]
        %v1378 = vld [vmem:[#allocation7 + $0x18] sm:$0xff]
        %v1379 = vld [vmem:[#allocation7 + $0x20] sm:$0xff]
        %v1380 = vld [vmem:[#allocation7 + $0x28] sm:$0xff]
        %v1381 = vld [vmem:[#allocation7 + $0x30] sm:$0xff]
        %v1382 = vld [vmem:[#allocation7 + $0x38] sm:$0xff]
        %v1383 = vld [vmem:[#allocation7 + $0x40] sm:$0xff]
        %v1384 = vld [vmem:[#allocation7 + $0x48] sm:$0xff]
        %v1385 = vld [vmem:[#allocation7 + $0x50] sm:$0xff]
        %v1386 = vld [vmem:[#allocation7 + $0x58] sm:$0xff]
        %v1387 = vld [vmem:[#allocation7 + $0x60] sm:$0xff]
        %v1388 = vld [vmem:[#allocation7 + $0x68] sm:$0xff]
        %v1389 = vld [vmem:[#allocation7 + $0x70] sm:$0xff]
        %v1390 = vld [vmem:[#allocation7 + $0x78] sm:$0xff]
        %v1391 = vld [vmem:[%s6] sm:$0x1]
        %v1393 = vlaneseq
        %v1394 = vshrl.u32 %v1393, 7
        %v1395 = vsub.s32 0, %v1394
        %v1396 = vrot.slane %v1391, %v1395
        %1398 = vmatprep.subr.mxu0 0.0
        %1399 = vmatpush1.msra.mxu0 %v1375
        %1400 = vmatprep.subr.mxu0 0.0
        %1401 = vmatpush1.msra.mxu0 %v1376
        %1402 = vmatprep.subr.mxu0 0.0
        %1403 = vmatpush1.msra.mxu0 %v1377
        %1404 = vmatprep.subr.mxu0 0.0
        %1405 = vmatpush1.msra.mxu0 %v1378
        %1406 = vmatprep.subr.mxu0 0.0
        %1407 = vmatpush1.msra.mxu0 %v1379
        %1408 = vmatprep.subr.mxu0 0.0
        %1409 = vmatpush1.msra.mxu0 %v1380
        %1410 = vmatprep.subr.mxu0 0.0
        %1411 = vmatpush1.msra.mxu0 %v1381
        %1412 = vmatprep.subr.mxu0 0.0
        %1413 = vmatpush1.msra.mxu0 %v1382
        %1414 = vmatprep.subr.mxu0 0.0
        %1415 = vmatpush1.msra.mxu0 %v1383
        %1416 = vmatprep.subr.mxu0 0.0
        %1417 = vmatpush1.msra.mxu0 %v1384
        %1418 = vmatprep.subr.mxu0 0.0
        %1419 = vmatpush1.msra.mxu0 %v1385
        %1420 = vmatprep.subr.mxu0 0.0
        %1421 = vmatpush1.msra.mxu0 %v1386
        %1422 = vmatprep.subr.mxu0 0.0
        %1423 = vmatpush1.msra.mxu0 %v1387
        %1424 = vmatprep.subr.mxu0 0.0
        %1425 = vmatpush1.msra.mxu0 %v1388
        %1426 = vmatprep.subr.mxu0 0.0
        %1427 = vmatpush1.msra.mxu0 %v1389
        %1428 = vmatprep.subr.mxu0 0.0
        %1429 = vmatpush1.msra.mxu0 %v1390
        %1430 = vmatprep.subr.mxu0 0.0
        %1431 = vmatpush1.msra.mxu0 0.0
        %1432 = vmatprep.subr.mxu0 0.0
        %1433 = vmatpush1.msra.mxu0 0.0
        %1434 = vmatprep.subr.mxu0 0.0
        %1435 = vmatpush1.msra.mxu0 0.0
        %1436 = vmatprep.subr.mxu0 0.0
        %1437 = vmatpush1.msra.mxu0 0.0
        %1438 = vmatprep.subr.mxu0 0.0
        %1439 = vmatpush1.msra.mxu0 0.0
        %1440 = vmatprep.subr.mxu0 0.0
        %1441 = vmatpush1.msra.mxu0 0.0
        %1442 = vmatprep.subr.mxu0 0.0
        %1443 = vmatpush1.msra.mxu0 0.0
        %1444 = vmatprep.subr.mxu0 0.0
        %1445 = vmatpush1.msra.mxu0 0.0
        %1446 = vmatprep.subr.mxu0 0.0
        %1447 = vmatpush1.msra.mxu0 0.0
        %1448 = vmatprep.subr.mxu0 0.0
        %1449 = vmatpush1.msra.mxu0 0.0
        %1450 = vmatprep.subr.mxu0 0.0
        %1451 = vmatpush1.msra.mxu0 0.0
        %1452 = vmatprep.subr.mxu0 0.0
        %1453 = vmatpush1.msra.mxu0 0.0
        %1454 = vmatprep.subr.mxu0 0.0
        %1455 = vmatpush1.msra.mxu0 0.0
        %1456 = vmatprep.subr.mxu0 0.0
        %1457 = vmatpush1.msra.mxu0 0.0
        %1458 = vmatprep.subr.mxu0 0.0
        %1459 = vmatpush1.msra.mxu0 0.0
        %1460 = vmatprep.subr.mxu0 0.0
        %1461 = vmatpush1.msra.mxu0 0.0
        %1462 = vmatprep.mubr.f32.mxu0 0.0
        %1463 = vmatmul.mubr.f32.gmra.mrb[0].mxu0 %v1343
        %v1464 = vpop.f32.mrb[0].mxu0
        %v1465 = vadd.f32 %v1396, %v1464
        %v1466 = vpop.f32.mrb[0].mxu0
        %1467 = vmatprep.mubr.f32.mxu0 0.0
        %1468 = vmatmul.mubr.f32.gmra.mrb[0].mxu0 %v1344
        %v1469 = vpop.f32.mrb[0].mxu0
        %v1470 = vadd.f32 %v1396, %v1469
        %v1471 = vpop.f32.mrb[0].mxu0
        %1472 = vmatprep.mubr.f32.mxu0 0.0
        %1473 = vmatmul.mubr.f32.gmra.mrb[0].mxu0 %v1345
        %v1474 = vpop.f32.mrb[0].mxu0
        %v1475 = vadd.f32 %v1396, %v1474
        %v1476 = vpop.f32.mrb[0].mxu0
        %1477 = vmatprep.mubr.f32.mxu0 0.0
        %1478 = vmatmul.mubr.f32.gmra.mrb[0].mxu0 %v1346
        %v1479 = vpop.f32.mrb[0].mxu0
        %v1480 = vadd.f32 %v1396, %v1479
        %v1481 = vpop.f32.mrb[0].mxu0
        %1482 = vmatprep.mubr.f32.mxu0 0.0
        %1483 = vmatmul.mubr.f32.gmra.mrb[0].mxu0 %v1347
        %v1484 = vpop.f32.mrb[0].mxu0
        %v1485 = vadd.f32 %v1396, %v1484
        %v1486 = vpop.f32.mrb[0].mxu0
        %1487 = vmatprep.mubr.f32.mxu0 0.0
        %1488 = vmatmul.mubr.f32.gmra.mrb[0].mxu0 %v1348
        %v1489 = vpop.f32.mrb[0].mxu0
        %v1490 = vadd.f32 %v1396, %v1489
        %v1491 = vpop.f32.mrb[0].mxu0
        %1492 = vmatprep.mubr.f32.mxu0 0.0
        %1493 = vmatmul.mubr.f32.gmra.mrb[0].mxu0 %v1349
        %v1494 = vpop.f32.mrb[0].mxu0
        %v1495 = vadd.f32 %v1396, %v1494
        %v1496 = vpop.f32.mrb[0].mxu0
        %1497 = vmatprep.mubr.f32.mxu0 0.0
        %1498 = vmatmul.mubr.f32.gmra.mrb[0].mxu0 %v1350
        %v1499 = vpop.f32.mrb[0].mxu0
        %v1500 = vadd.f32 %v1396, %v1499
        %v1501 = vpop.f32.mrb[0].mxu0
        %1502 = vmatprep.mubr.f32.mxu0 0.0
        %1503 = vmatmul.mubr.f32.gmra.mrb[0].mxu0 %v1351
        %v1504 = vpop.f32.mrb[0].mxu0
        %v1505 = vadd.f32 %v1396, %v1504
        %v1506 = vpop.f32.mrb[0].mxu0
        %1507 = vmatprep.mubr.f32.mxu0 0.0
        %1508 = vmatmul.mubr.f32.gmra.mrb[0].mxu0 %v1352
        %v1509 = vpop.f32.mrb[0].mxu0
        %v1510 = vadd.f32 %v1396, %v1509
        %v1511 = vpop.f32.mrb[0].mxu0
        %1512 = vmatprep.mubr.f32.mxu0 0.0
        %1513 = vmatmul.mubr.f32.gmra.mrb[0].mxu0 %v1353
        %v1514 = vpop.f32.mrb[0].mxu0
        %v1515 = vadd.f32 %v1396, %v1514
        %v1516 = vpop.f32.mrb[0].mxu0
        %1517 = vmatprep.mubr.f32.mxu0 0.0
        %1518 = vmatmul.mubr.f32.gmra.mrb[0].mxu0 %v1354
        %v1519 = vpop.f32.mrb[0].mxu0
        %v1520 = vadd.f32 %v1396, %v1519
        %v1521 = vpop.f32.mrb[0].mxu0
        %1522 = vmatprep.mubr.f32.mxu0 0.0
        %1523 = vmatmul.mubr.f32.gmra.mrb[0].mxu0 %v1355
        %v1524 = vpop.f32.mrb[0].mxu0
        %v1525 = vadd.f32 %v1396, %v1524
        %v1526 = vpop.f32.mrb[0].mxu0
        %1527 = vmatprep.mubr.f32.mxu0 0.0
        %1528 = vmatmul.mubr.f32.gmra.mrb[0].mxu0 %v1356
        %v1529 = vpop.f32.mrb[0].mxu0
        %v1530 = vadd.f32 %v1396, %v1529
        %v1531 = vpop.f32.mrb[0].mxu0
        %1532 = vmatprep.mubr.f32.mxu0 0.0
        %1533 = vmatmul.mubr.f32.gmra.mrb[0].mxu0 %v1357
        %v1534 = vpop.f32.mrb[0].mxu0
        %v1535 = vadd.f32 %v1396, %v1534
        %v1536 = vpop.f32.mrb[0].mxu0
        %1537 = vmatprep.mubr.f32.mxu0 0.0
        %1538 = vmatmul.mubr.f32.gmra.mrb[0].mxu0 %v1358
        %v1539 = vpop.f32.mrb[0].mxu0
        %v1540 = vadd.f32 %v1396, %v1539
        %v1541 = vpop.f32.mrb[0].mxu0
        %1542 = vmatprep.mubr.f32.mxu0 0.0
        %1543 = vmatmul.mubr.f32.gmra.mrb[0].mxu0 %v1359
        %v1544 = vpop.f32.mrb[0].mxu0
        %v1545 = vadd.f32 %v1396, %v1544
        %v1546 = vpop.f32.mrb[0].mxu0
        %1547 = vmatprep.mubr.f32.mxu0 0.0
        %1548 = vmatmul.mubr.f32.gmra.mrb[0].mxu0 %v1360
        %v1549 = vpop.f32.mrb[0].mxu0
        %v1550 = vadd.f32 %v1396, %v1549
        %v1551 = vpop.f32.mrb[0].mxu0
        %1552 = vmatprep.mubr.f32.mxu0 0.0
        %1553 = vmatmul.mubr.f32.gmra.mrb[0].mxu0 %v1361
        %v1554 = vpop.f32.mrb[0].mxu0
        %v1555 = vadd.f32 %v1396, %v1554
        %v1556 = vpop.f32.mrb[0].mxu0
        %1557 = vmatprep.mubr.f32.mxu0 0.0
        %1558 = vmatmul.mubr.f32.gmra.mrb[0].mxu0 %v1362
        %v1559 = vpop.f32.mrb[0].mxu0
        %v1560 = vadd.f32 %v1396, %v1559
        %v1561 = vpop.f32.mrb[0].mxu0
        %1562 = vmatprep.mubr.f32.mxu0 0.0
        %1563 = vmatmul.mubr.f32.gmra.mrb[0].mxu0 %v1363
        %v1564 = vpop.f32.mrb[0].mxu0
        %v1565 = vadd.f32 %v1396, %v1564
        %v1566 = vpop.f32.mrb[0].mxu0
        %1567 = vmatprep.mubr.f32.mxu0 0.0
        %1568 = vmatmul.mubr.f32.gmra.mrb[0].mxu0 %v1364
        %v1569 = vpop.f32.mrb[0].mxu0
        %v1570 = vadd.f32 %v1396, %v1569
        %v1571 = vpop.f32.mrb[0].mxu0
        %1572 = vmatprep.mubr.f32.mxu0 0.0
        %1573 = vmatmul.mubr.f32.gmra.mrb[0].mxu0 %v1365
        %v1574 = vpop.f32.mrb[0].mxu0
        %v1575 = vadd.f32 %v1396, %v1574
        %v1576 = vpop.f32.mrb[0].mxu0
        %1577 = vmatprep.mubr.f32.mxu0 0.0
        %1578 = vmatmul.mubr.f32.gmra.mrb[0].mxu0 %v1366
        %v1579 = vpop.f32.mrb[0].mxu0
        %v1580 = vadd.f32 %v1396, %v1579
        %v1581 = vpop.f32.mrb[0].mxu0
        %1582 = vmatprep.mubr.f32.mxu0 0.0
        %1583 = vmatmul.mubr.f32.gmra.mrb[0].mxu0 %v1367
        %v1584 = vpop.f32.mrb[0].mxu0
        %v1585 = vadd.f32 %v1396, %v1584
        %v1586 = vpop.f32.mrb[0].mxu0
        %1587 = vmatprep.mubr.f32.mxu0 0.0
        %1588 = vmatmul.mubr.f32.gmra.mrb[0].mxu0 %v1368
        %v1589 = vpop.f32.mrb[0].mxu0
        %v1590 = vadd.f32 %v1396, %v1589
        %v1591 = vpop.f32.mrb[0].mxu0
        %1592 = vmatprep.mubr.f32.mxu0 0.0
        %1593 = vmatmul.mubr.f32.gmra.mrb[0].mxu0 %v1369
        %v1594 = vpop.f32.mrb[0].mxu0
        %v1595 = vadd.f32 %v1396, %v1594
        %v1596 = vpop.f32.mrb[0].mxu0
        %1597 = vmatprep.mubr.f32.mxu0 0.0
        %1598 = vmatmul.mubr.f32.gmra.mrb[0].mxu0 %v1370
        %v1599 = vpop.f32.mrb[0].mxu0
        %v1600 = vadd.f32 %v1396, %v1599
        %v1601 = vpop.f32.mrb[0].mxu0
        %1602 = vmatprep.mubr.f32.mxu0 0.0
        %1603 = vmatmul.mubr.f32.gmra.mrb[0].mxu0 %v1371
        %v1604 = vpop.f32.mrb[0].mxu0
        %v1605 = vadd.f32 %v1396, %v1604
        %v1606 = vpop.f32.mrb[0].mxu0
        %1607 = vmatprep.mubr.f32.mxu0 0.0
        %1608 = vmatmul.mubr.f32.gmra.mrb[0].mxu0 %v1372
        %v1609 = vpop.f32.mrb[0].mxu0
        %v1610 = vadd.f32 %v1396, %v1609
        %v1611 = vpop.f32.mrb[0].mxu0
        %1612 = vmatprep.mubr.f32.mxu0 0.0
        %1613 = vmatmul.mubr.f32.gmra.mrb[0].mxu0 %v1373
        %v1614 = vpop.f32.mrb[0].mxu0
        %v1615 = vadd.f32 %v1396, %v1614
        %v1616 = vpop.f32.mrb[0].mxu0
        %1617 = vmatprep.mubr.f32.mxu0 0.0
        %1618 = vmatmul.mubr.f32.gmra.mrb[0].mxu0 %v1374
        %v1619 = vpop.f32.mrb[0].mxu0
        %v1620 = vadd.f32 %v1396, %v1619
        %v1621 = vpop.f32.mrb[0].mxu0
        %1622 = vdwg.mxu0
        %v1623 = vmax.f32 %v1465, 0.0
        %v1624 = vmax.f32 %v1470, 0.0
        %v1625 = vmax.f32 %v1475, 0.0
        %v1626 = vmax.f32 %v1480, 0.0
        %v1627 = vmax.f32 %v1485, 0.0
        %v1628 = vmax.f32 %v1490, 0.0
        %v1629 = vmax.f32 %v1495, 0.0
        %v1630 = vmax.f32 %v1500, 0.0
        %v1631 = vmax.f32 %v1505, 0.0
        %v1632 = vmax.f32 %v1510, 0.0
        %v1633 = vmax.f32 %v1515, 0.0
        %v1634 = vmax.f32 %v1520, 0.0
        %v1635 = vmax.f32 %v1525, 0.0
        %v1636 = vmax.f32 %v1530, 0.0
        %v1637 = vmax.f32 %v1535, 0.0
        %v1638 = vmax.f32 %v1540, 0.0
        %v1639 = vmax.f32 %v1545, 0.0
        %v1640 = vmax.f32 %v1550, 0.0
        %v1641 = vmax.f32 %v1555, 0.0
        %v1642 = vmax.f32 %v1560, 0.0
        %v1643 = vmax.f32 %v1565, 0.0
        %v1644 = vmax.f32 %v1570, 0.0
        %v1645 = vmax.f32 %v1575, 0.0
        %v1646 = vmax.f32 %v1580, 0.0
        %v1647 = vmax.f32 %v1585, 0.0
        %v1648 = vmax.f32 %v1590, 0.0
        %v1649 = vmax.f32 %v1595, 0.0
        %v1650 = vmax.f32 %v1600, 0.0
        %v1651 = vmax.f32 %v1605, 0.0
        %v1652 = vmax.f32 %v1610, 0.0
        %v1653 = vmax.f32 %v1615, 0.0
        %v1654 = vmax.f32 %v1620, 0.0
        %v1655 = vld [vmem:[#allocation9] sm:$0xff]
        %v1656 = vld [vmem:[#allocation9 + $0x8] sm:$0xff]
        %v1657 = vld [vmem:[#allocation9 + $0x10] sm:$0xff]
        %v1658 = vld [vmem:[#allocation9 + $0x18] sm:$0xff]
        %v1659 = vld [vmem:[#allocation9 + $0x20] sm:$0xff]
        %v1660 = vld [vmem:[#allocation9 + $0x28] sm:$0xff]
        %v1661 = vld [vmem:[#allocation9 + $0x30] sm:$0xff]
        %v1662 = vld [vmem:[#allocation9 + $0x38] sm:$0xff]
        %v1663 = vld [vmem:[#allocation9 + $0x40] sm:$0xff]
        %v1664 = vld [vmem:[#allocation9 + $0x48] sm:$0xff]
        %v1665 = vld [vmem:[#allocation9 + $0x50] sm:$0xff]
        %v1666 = vld [vmem:[#allocation9 + $0x58] sm:$0xff]
        %v1667 = vld [vmem:[#allocation9 + $0x60] sm:$0xff]
        %v1668 = vld [vmem:[#allocation9 + $0x68] sm:$0xff]
        %v1669 = vld [vmem:[#allocation9 + $0x70] sm:$0xff]
        %v1670 = vld [vmem:[#allocation9 + $0x78] sm:$0xff]
        %v1671 = vld [vmem:[%s8] sm:$0x1]
        %v1673 = vlaneseq
        %v1674 = vshrl.u32 %v1673, 7
        %v1675 = vsub.s32 0, %v1674
        %v1676 = vrot.slane %v1671, %v1675
        %1678 = vmatprep.subr.mxu0 0.0
        %1679 = vmatpush1.msra.mxu0 %v1655
        %1680 = vmatprep.subr.mxu0 0.0
        %1681 = vmatpush1.msra.mxu0 %v1656
        %1682 = vmatprep.subr.mxu0 0.0
        %1683 = vmatpush1.msra.mxu0 %v1657
        %1684 = vmatprep.subr.mxu0 0.0
        %1685 = vmatpush1.msra.mxu0 %v1658
        %1686 = vmatprep.subr.mxu0 0.0
        %1687 = vmatpush1.msra.mxu0 %v1659
        %1688 = vmatprep.subr.mxu0 0.0
        %1689 = vmatpush1.msra.mxu0 %v1660
        %1690 = vmatprep.subr.mxu0 0.0
        %1691 = vmatpush1.msra.mxu0 %v1661
        %1692 = vmatprep.subr.mxu0 0.0
        %1693 = vmatpush1.msra.mxu0 %v1662
        %1694 = vmatprep.subr.mxu0 0.0
        %1695 = vmatpush1.msra.mxu0 %v1663
        %1696 = vmatprep.subr.mxu0 0.0
        %1697 = vmatpush1.msra.mxu0 %v1664
        %1698 = vmatprep.subr.mxu0 0.0
        %1699 = vmatpush1.msra.mxu0 %v1665
        %1700 = vmatprep.subr.mxu0 0.0
        %1701 = vmatpush1.msra.mxu0 %v1666
        %1702 = vmatprep.subr.mxu0 0.0
        %1703 = vmatpush1.msra.mxu0 %v1667
        %1704 = vmatprep.subr.mxu0 0.0
        %1705 = vmatpush1.msra.mxu0 %v1668
        %1706 = vmatprep.subr.mxu0 0.0
        %1707 = vmatpush1.msra.mxu0 %v1669
        %1708 = vmatprep.subr.mxu0 0.0
        %1709 = vmatpush1.msra.mxu0 %v1670
        %1710 = vmatprep.subr.mxu0 0.0
        %1711 = vmatpush1.msra.mxu0 0.0
        %1712 = vmatprep.subr.mxu0 0.0
        %1713 = vmatpush1.msra.mxu0 0.0
        %1714 = vmatprep.subr.mxu0 0.0
        %1715 = vmatpush1.msra.mxu0 0.0
        %1716 = vmatprep.subr.mxu0 0.0
        %1717 = vmatpush1.msra.mxu0 0.0
        %1718 = vmatprep.subr.mxu0 0.0
        %1719 = vmatpush1.msra.mxu0 0.0
        %1720 = vmatprep.subr.mxu0 0.0
        %1721 = vmatpush1.msra.mxu0 0.0
        %1722 = vmatprep.subr.mxu0 0.0
        %1723 = vmatpush1.msra.mxu0 0.0
        %1724 = vmatprep.subr.mxu0 0.0
        %1725 = vmatpush1.msra.mxu0 0.0
        %1726 = vmatprep.subr.mxu0 0.0
        %1727 = vmatpush1.msra.mxu0 0.0
        %1728 = vmatprep.subr.mxu0 0.0
        %1729 = vmatpush1.msra.mxu0 0.0
        %1730 = vmatprep.subr.mxu0 0.0
        %1731 = vmatpush1.msra.mxu0 0.0
        %1732 = vmatprep.subr.mxu0 0.0
        %1733 = vmatpush1.msra.mxu0 0.0
        %1734 = vmatprep.subr.mxu0 0.0
        %1735 = vmatpush1.msra.mxu0 0.0
        %1736 = vmatprep.subr.mxu0 0.0
        %1737 = vmatpush1.msra.mxu0 0.0
        %1738 = vmatprep.subr.mxu0 0.0
        %1739 = vmatpush1.msra.mxu0 0.0
        %1740 = vmatprep.subr.mxu0 0.0
        %1741 = vmatpush1.msra.mxu0 0.0
        %1742 = vmatprep.mubr.f32.mxu0 0.0
        %1743 = vmatmul.mubr.f32.gmra.mrb[0].mxu0 %v1623
        %v1744 = vpop.f32.mrb[0].mxu0
        %v1745 = vadd.f32 %v1676, %v1744
        %v1746 = vpop.f32.mrb[0].mxu0
        %1747 = vmatprep.mubr.f32.mxu0 0.0
        %1748 = vmatmul.mubr.f32.gmra.mrb[0].mxu0 %v1624
        %v1749 = vpop.f32.mrb[0].mxu0
        %v1750 = vadd.f32 %v1676, %v1749
        %v1751 = vpop.f32.mrb[0].mxu0
        %1752 = vmatprep.mubr.f32.mxu0 0.0
        %1753 = vmatmul.mubr.f32.gmra.mrb[0].mxu0 %v1625
        %v1754 = vpop.f32.mrb[0].mxu0
        %v1755 = vadd.f32 %v1676, %v1754
        %v1756 = vpop.f32.mrb[0].mxu0
        %1757 = vmatprep.mubr.f32.mxu0 0.0
        %1758 = vmatmul.mubr.f32.gmra.mrb[0].mxu0 %v1626
        %v1759 = vpop.f32.mrb[0].mxu0
        %v1760 = vadd.f32 %v1676, %v1759
        %v1761 = vpop.f32.mrb[0].mxu0
        %1762 = vmatprep.mubr.f32.mxu0 0.0
        %1763 = vmatmul.mubr.f32.gmra.mrb[0].mxu0 %v1627
        %v1764 = vpop.f32.mrb[0].mxu0
        %v1765 = vadd.f32 %v1676, %v1764
        %v1766 = vpop.f32.mrb[0].mxu0
        %1767 = vmatprep.mubr.f32.mxu0 0.0
        %1768 = vmatmul.mubr.f32.gmra.mrb[0].mxu0 %v1628
        %v1769 = vpop.f32.mrb[0].mxu0
        %v1770 = vadd.f32 %v1676, %v1769
        %v1771 = vpop.f32.mrb[0].mxu0
        %1772 = vmatprep.mubr.f32.mxu0 0.0
        %1773 = vmatmul.mubr.f32.gmra.mrb[0].mxu0 %v1629
        %v1774 = vpop.f32.mrb[0].mxu0
        %v1775 = vadd.f32 %v1676, %v1774
        %v1776 = vpop.f32.mrb[0].mxu0
        %1777 = vmatprep.mubr.f32.mxu0 0.0
        %1778 = vmatmul.mubr.f32.gmra.mrb[0].mxu0 %v1630
        %v1779 = vpop.f32.mrb[0].mxu0
        %v1780 = vadd.f32 %v1676, %v1779
        %v1781 = vpop.f32.mrb[0].mxu0
        %1782 = vmatprep.mubr.f32.mxu0 0.0
        %1783 = vmatmul.mubr.f32.gmra.mrb[0].mxu0 %v1631
        %v1784 = vpop.f32.mrb[0].mxu0
        %v1785 = vadd.f32 %v1676, %v1784
        %v1786 = vpop.f32.mrb[0].mxu0
        %1787 = vmatprep.mubr.f32.mxu0 0.0
        %1788 = vmatmul.mubr.f32.gmra.mrb[0].mxu0 %v1632
        %v1789 = vpop.f32.mrb[0].mxu0
        %v1790 = vadd.f32 %v1676, %v1789
        %v1791 = vpop.f32.mrb[0].mxu0
        %1792 = vmatprep.mubr.f32.mxu0 0.0
        %1793 = vmatmul.mubr.f32.gmra.mrb[0].mxu0 %v1633
        %v1794 = vpop.f32.mrb[0].mxu0
        %v1795 = vadd.f32 %v1676, %v1794
        %v1796 = vpop.f32.mrb[0].mxu0
        %1797 = vmatprep.mubr.f32.mxu0 0.0
        %1798 = vmatmul.mubr.f32.gmra.mrb[0].mxu0 %v1634
        %v1799 = vpop.f32.mrb[0].mxu0
        %v1800 = vadd.f32 %v1676, %v1799
        %v1801 = vpop.f32.mrb[0].mxu0
        %1802 = vmatprep.mubr.f32.mxu0 0.0
        %1803 = vmatmul.mubr.f32.gmra.mrb[0].mxu0 %v1635
        %v1804 = vpop.f32.mrb[0].mxu0
        %v1805 = vadd.f32 %v1676, %v1804
        %v1806 = vpop.f32.mrb[0].mxu0
        %1807 = vmatprep.mubr.f32.mxu0 0.0
        %1808 = vmatmul.mubr.f32.gmra.mrb[0].mxu0 %v1636
        %v1809 = vpop.f32.mrb[0].mxu0
        %v1810 = vadd.f32 %v1676, %v1809
        %v1811 = vpop.f32.mrb[0].mxu0
        %1812 = vmatprep.mubr.f32.mxu0 0.0
        %1813 = vmatmul.mubr.f32.gmra.mrb[0].mxu0 %v1637
        %v1814 = vpop.f32.mrb[0].mxu0
        %v1815 = vadd.f32 %v1676, %v1814
        %v1816 = vpop.f32.mrb[0].mxu0
        %1817 = vmatprep.mubr.f32.mxu0 0.0
        %1818 = vmatmul.mubr.f32.gmra.mrb[0].mxu0 %v1638
        %v1819 = vpop.f32.mrb[0].mxu0
        %v1820 = vadd.f32 %v1676, %v1819
        %v1821 = vpop.f32.mrb[0].mxu0
        %1822 = vmatprep.mubr.f32.mxu0 0.0
        %1823 = vmatmul.mubr.f32.gmra.mrb[0].mxu0 %v1639
        %v1824 = vpop.f32.mrb[0].mxu0
        %v1825 = vadd.f32 %v1676, %v1824
        %v1826 = vpop.f32.mrb[0].mxu0
        %1827 = vmatprep.mubr.f32.mxu0 0.0
        %1828 = vmatmul.mubr.f32.gmra.mrb[0].mxu0 %v1640
        %v1829 = vpop.f32.mrb[0].mxu0
        %v1830 = vadd.f32 %v1676, %v1829
        %v1831 = vpop.f32.mrb[0].mxu0
        %1832 = vmatprep.mubr.f32.mxu0 0.0
        %1833 = vmatmul.mubr.f32.gmra.mrb[0].mxu0 %v1641
        %v1834 = vpop.f32.mrb[0].mxu0
        %v1835 = vadd.f32 %v1676, %v1834
        %v1836 = vpop.f32.mrb[0].mxu0
        %1837 = vmatprep.mubr.f32.mxu0 0.0
        %1838 = vmatmul.mubr.f32.gmra.mrb[0].mxu0 %v1642
        %v1839 = vpop.f32.mrb[0].mxu0
        %v1840 = vadd.f32 %v1676, %v1839
        %v1841 = vpop.f32.mrb[0].mxu0
        %1842 = vmatprep.mubr.f32.mxu0 0.0
        %1843 = vmatmul.mubr.f32.gmra.mrb[0].mxu0 %v1643
        %v1844 = vpop.f32.mrb[0].mxu0
        %v1845 = vadd.f32 %v1676, %v1844
        %v1846 = vpop.f32.mrb[0].mxu0
        %1847 = vmatprep.mubr.f32.mxu0 0.0
        %1848 = vmatmul.mubr.f32.gmra.mrb[0].mxu0 %v1644
        %v1849 = vpop.f32.mrb[0].mxu0
        %v1850 = vadd.f32 %v1676, %v1849
        %v1851 = vpop.f32.mrb[0].mxu0
        %1852 = vmatprep.mubr.f32.mxu0 0.0
        %1853 = vmatmul.mubr.f32.gmra.mrb[0].mxu0 %v1645
        %v1854 = vpop.f32.mrb[0].mxu0
        %v1855 = vadd.f32 %v1676, %v1854
        %v1856 = vpop.f32.mrb[0].mxu0
        %1857 = vmatprep.mubr.f32.mxu0 0.0
        %1858 = vmatmul.mubr.f32.gmra.mrb[0].mxu0 %v1646
        %v1859 = vpop.f32.mrb[0].mxu0
        %v1860 = vadd.f32 %v1676, %v1859
        %v1861 = vpop.f32.mrb[0].mxu0
        %1862 = vmatprep.mubr.f32.mxu0 0.0
        %1863 = vmatmul.mubr.f32.gmra.mrb[0].mxu0 %v1647
        %v1864 = vpop.f32.mrb[0].mxu0
        %v1865 = vadd.f32 %v1676, %v1864
        %v1866 = vpop.f32.mrb[0].mxu0
        %1867 = vmatprep.mubr.f32.mxu0 0.0
        %1868 = vmatmul.mubr.f32.gmra.mrb[0].mxu0 %v1648
        %v1869 = vpop.f32.mrb[0].mxu0
        %v1870 = vadd.f32 %v1676, %v1869
        %v1871 = vpop.f32.mrb[0].mxu0
        %1872 = vmatprep.mubr.f32.mxu0 0.0
        %1873 = vmatmul.mubr.f32.gmra.mrb[0].mxu0 %v1649
        %v1874 = vpop.f32.mrb[0].mxu0
        %v1875 = vadd.f32 %v1676, %v1874
        %v1876 = vpop.f32.mrb[0].mxu0
        %1877 = vmatprep.mubr.f32.mxu0 0.0
        %1878 = vmatmul.mubr.f32.gmra.mrb[0].mxu0 %v1650
        %v1879 = vpop.f32.mrb[0].mxu0
        %v1880 = vadd.f32 %v1676, %v1879
        %v1881 = vpop.f32.mrb[0].mxu0
        %1882 = vmatprep.mubr.f32.mxu0 0.0
        %1883 = vmatmul.mubr.f32.gmra.mrb[0].mxu0 %v1651
        %v1884 = vpop.f32.mrb[0].mxu0
        %v1885 = vadd.f32 %v1676, %v1884
        %v1886 = vpop.f32.mrb[0].mxu0
        %1887 = vmatprep.mubr.f32.mxu0 0.0
        %1888 = vmatmul.mubr.f32.gmra.mrb[0].mxu0 %v1652
        %v1889 = vpop.f32.mrb[0].mxu0
        %v1890 = vadd.f32 %v1676, %v1889
        %v1891 = vpop.f32.mrb[0].mxu0
        %1892 = vmatprep.mubr.f32.mxu0 0.0
        %1893 = vmatmul.mubr.f32.gmra.mrb[0].mxu0 %v1653
        %v1894 = vpop.f32.mrb[0].mxu0
        %v1895 = vadd.f32 %v1676, %v1894
        %v1896 = vpop.f32.mrb[0].mxu0
        %1897 = vmatprep.mubr.f32.mxu0 0.0
        %1898 = vmatmul.mubr.f32.gmra.mrb[0].mxu0 %v1654
        %v1899 = vpop.f32.mrb[0].mxu0
        %v1900 = vadd.f32 %v1676, %v1899
        %v1901 = vpop.f32.mrb[0].mxu0
        %1902 = vdwg.mxu0
        %1903 = vst [vmem:[%s412] sm:$0xff] %v1745
        %1904 = vst [vmem:[%s412 + $0x8] sm:$0xff] %v1750
        %1905 = vst [vmem:[%s412 + $0x10] sm:$0xff] %v1755
        %1906 = vst [vmem:[%s412 + $0x18] sm:$0xff] %v1760
        %1907 = vst [vmem:[%s412 + $0x20] sm:$0xff] %v1765
        %1908 = vst [vmem:[%s412 + $0x28] sm:$0xff] %v1770
        %1909 = vst [vmem:[%s412 + $0x30] sm:$0xff] %v1775
        %1910 = vst [vmem:[%s412 + $0x38] sm:$0xff] %v1780
        %1911 = vst [vmem:[%s412 + $0x40] sm:$0xff] %v1785
        %1912 = vst [vmem:[%s412 + $0x48] sm:$0xff] %v1790
        %1913 = vst [vmem:[%s412 + $0x50] sm:$0xff] %v1795
        %1914 = vst [vmem:[%s412 + $0x58] sm:$0xff] %v1800
        %1915 = vst [vmem:[%s412 + $0x60] sm:$0xff] %v1805
        %1916 = vst [vmem:[%s412 + $0x68] sm:$0xff] %v1810
        %1917 = vst [vmem:[%s412 + $0x70] sm:$0xff] %v1815
        %1918 = vst [vmem:[%s412 + $0x78] sm:$0xff] %v1820
        %1919 = vst [vmem:[%s412 + $0x80] sm:$0xff] %v1825
        %1920 = vst [vmem:[%s412 + $0x88] sm:$0xff] %v1830
        %1921 = vst [vmem:[%s412 + $0x90] sm:$0xff] %v1835
        %1922 = vst [vmem:[%s412 + $0x98] sm:$0xff] %v1840
        %1923 = vst [vmem:[%s412 + $0xa0] sm:$0xff] %v1845
        %1924 = vst [vmem:[%s412 + $0xa8] sm:$0xff] %v1850
        %1925 = vst [vmem:[%s412 + $0xb0] sm:$0xff] %v1855
        %1926 = vst [vmem:[%s412 + $0xb8] sm:$0xff] %v1860
        %1927 = vst [vmem:[%s412 + $0xc0] sm:$0xff] %v1865
        %1928 = vst [vmem:[%s412 + $0xc8] sm:$0xff] %v1870
        %1929 = vst [vmem:[%s412 + $0xd0] sm:$0xff] %v1875
        %1930 = vst [vmem:[%s412 + $0xd8] sm:$0xff] %v1880
        %1931 = vst [vmem:[%s412 + $0xe0] sm:$0xff] %v1885
        %1932 = vst [vmem:[%s412 + $0xe8] sm:$0xff] %v1890
        %1933 = vst [vmem:[%s412 + $0xf0] sm:$0xff] %v1895
        %1934 = vst [vmem:[%s412 + $0xf8] sm:$0xff] %v1900
        %s1935 = smul.u32 32, %s25
        %p1936 = scmp.lt.s32.totalorder %s1935, 63
        %s1937 = scalar_select %p1936, %s1935, 63
        %s1938 = smul.addr %s1937, 8
        %s1939 = scalar_lea.vmem %s9, %s1938
        // Predicated region
        $region77: #{fcn2_forward.1} parent=55 // pred_check
          %p1940 = pneg %p237
        $region78: #{fcn2_forward.1} parent=55 // pred_check_branch
          %1942 = sbr.rel (%p1940) target = $region80
        $region79: #{fcn2_forward.1} parent=55 // pred_region
          %s1943 = smul.u32 32, %s25
        $region80: #{fcn2_forward.1} parent=55 // pred_fallthru
          _
      $region56: #{fcn2_forward.1} parent=5 // pred_fallthru
        _
      %p1944 = scmp.le.s32.totalorder 2, %s20
      // Predicated region
      $region81: #{fcn2_forward.1} parent=5 // pred_check
        %p1945 = pneg %p1944
      $region82: #{fcn2_forward.1} parent=5 // pred_check_branch
        %1947 = sbr.rel (%p1945) target = $region84
      $region83: #{fcn2_forward.1} parent=5 // pred_region
        %s1948 = ssub.s32 %s20, 2
        // Predicated region
        $region85: #{fcn2_forward.1} parent=83 // pred_check
          %p1949 = pneg %p243
        $region86: #{fcn2_forward.1} parent=83 // pred_check_branch
          %1951 = sbr.rel (%p1949) target = $region88
        $region87: #{fcn2_forward.1} parent=83 // pred_region
          %s1952 = smul.u32 32, %s26
          %p1953 = scmp.lt.s32.totalorder %s1952, 63
          %s1954 = scalar_select %p1953, %s1952, 63
          %s1955 = smul.addr %s1954, 8
          %s1956 = scalar_lea.vmem %s9, %s1955
        $region88: #{fcn2_forward.1} parent=83 // pred_fallthru
          _
      $region84: #{fcn2_forward.1} parent=5 // pred_fallthru
        _
    $region6: #{fcn2_forward.1} parent=1 // loop_footer
      %s24 = sadd.s32 1, %s20
    $region7: #{fcn2_forward.1} parent=1 // loop_footer_branch
      %19 = sbr.rel target = $region3
    $region8: #{fcn2_forward.1} parent=1 // loop_exit
      _
    %1957 = vsyncpa [#allocation3], 1
    %s1958 = scalar_lea.sflag [#allocation3], 1
    %1959 = vsyncpa %s1958, 1
    %1960 = vsyncpa [#allocation5], 1
    %1961 = vsyncpa [#allocation8], 1

</llo_original>
